<compile_context>
chip_gen: v7x
topology: tpu7x:2x2x1
jax: 0.10.0
libtpu: 0.0.40
codegen_flags: <defaults>
</compile_context>

<pallas_src>
import math
import jax
import jax.numpy as jnp
from jax.experimental import pallas as pl
from jax.experimental.pallas import tpu as pltpu


# ----------------------------------------------------------------------------
# Wrapper-side weight plumbing (pure XLA, outside the kernel)
# ----------------------------------------------------------------------------
def _gate_blockdiag(wf_t, wb_t, H):
    """wf_t: [Rf, 4H], wb_t: [Rb, 4H] (gate order i,f,g,o).

    Returns [(Rf+Rb), 8H] block-diagonal weight with direction-minor gate
    column layout: [i_f, i_b, f_f, f_b, g_f, g_b, o_f, o_b].
    Row block 0:Rf only feeds fwd gate columns; Rf:Rf+Rb only feeds bwd ones.
    """
    Rf, Rb = wf_t.shape[0], wb_t.shape[0]
    zf = jnp.zeros((Rf, H), wf_t.dtype)
    zb = jnp.zeros((Rb, H), wb_t.dtype)
    top, bot = [], []
    for k in range(4):                      # gates i, f, g, o
        top += [wf_t[:, k * H:(k + 1) * H], zf]
        bot += [zb, wb_t[:, k * H:(k + 1) * H]]
    return jnp.concatenate(
        [jnp.concatenate(top, axis=1), jnp.concatenate(bot, axis=1)], axis=0)


def _gate_interleave_bias(bf, bb, H):
    """bf, bb: [4H] combined (b_ih+b_hh) biases -> [1, 8H] direction-minor."""
    chunks = []
    for k in range(4):
        chunks += [bf[k * H:(k + 1) * H], bb[k * H:(k + 1) * H]]
    return jnp.concatenate(chunks)[None, :]


# ----------------------------------------------------------------------------
# Pallas kernel + wrapper
# ----------------------------------------------------------------------------
def bilstm_forward(x, params):
    """x: [B, T, D] batch-first (PyTorch convention); returns [B, T, O]."""
    B, T, D = x.shape
    H = params["w_hh_f"].shape[1]            # torch layout: [4H, H]
    O = params["w_lin"].shape[0]             # torch layout: [O, 2H]
    O_pad = ((O + 127) // 128) * 128         # lane-dense output stores

    # ---- x prep: time-major, then concat with the time-reversed sequence so a
    #      single block-diagonal matmul produces fwd gates @ t and bwd gates @ T-1-t
    xt = jnp.transpose(x, (1, 0, 2))                       # [T, B, D]
    x_ext = jnp.concatenate([xt, xt[::-1]], axis=-1)       # [T, B, 2D]
    x_ext = x_ext.reshape(T * B, 2 * D).astype(jnp.bfloat16)

    # ---- fused, direction-minor weights (bf16 MXU operands, f32 biases) ----
    w_ih_cat = _gate_blockdiag(params["w_ih_f"].T, params["w_ih_b"].T, H
                               ).astype(jnp.bfloat16)       # [2D, 8H]
    w_hh_cat = _gate_blockdiag(params["w_hh_f"].T, params["w_hh_b"].T, H
                               ).astype(jnp.bfloat16)       # [2H, 8H]
    b_cat = _gate_interleave_bias(params["b_ih_f"] + params["b_hh_f"],
                                  params["b_ih_b"] + params["b_hh_b"], H)  # [1, 8H] f32

    wl = params["w_lin"].T                                  # [2H, O]
    pad_cols = ((0, 0), (0, O_pad - O))
    wl_f = jnp.pad(wl[:H], pad_cols).astype(jnp.bfloat16)   # [H, O_pad]
    wl_b = jnp.pad(wl[H:], pad_cols).astype(jnp.bfloat16)   # [H, O_pad]
    bl = jnp.pad(params["b_lin"], (0, O_pad - O))[None, :]  # [1, O_pad] f32

    def kernel(x_ref, wih_ref, whh_ref, b_ref, wlf_ref, wlb_ref, bl_ref,
               out_ref, gx_ref, recf_ref, recb_ref):
        # --- one MXU matmul for ALL input gates of BOTH directions ---
        # gx[t*B:(t+1)*B, :] holds (direction-minor) fwd gates for time t and
        # bwd gates for time T-1-t.
        gx_ref[...] = jnp.dot(x_ref[...], wih_ref[...],
                              preferred_element_type=jnp.float32) + b_ref[...]

        whh = whh_ref[...]                        # [2H, 8H] bf16, block-diagonal
        h = jnp.zeros((B, 2 * H), jnp.float32)    # [h_fwd | h_bwd]  (f32 state)
        c = jnp.zeros((B, 2 * H), jnp.float32)

        # --- fully-unrolled serial recurrence: one fused dot per step ---
        for t in range(T):
            g = gx_ref[t * B:(t + 1) * B, :] + jnp.dot(
                h.astype(whh.dtype), whh, preferred_element_type=jnp.float32)
            sg = jax.nn.sigmoid(g)                # whole-vreg EUP pass
            tg = jnp.tanh(g)                      # whole-vreg EUP pass
            i_g = sg[:, 0:2 * H]                  # [i_f | i_b]
            f_g = sg[:, 2 * H:4 * H]              # [f_f | f_b]
            g_g = tg[:, 4 * H:6 * H]              # [g_f | g_b]
            o_g = sg[:, 6 * H:8 * H]              # [o_f | o_b]
            c = f_g * c + i_g * g_g
            h = o_g * jnp.tanh(c)
            recf_ref[t * B:(t + 1) * B, :] = h[:, :H]              # fwd @ t
            recb_ref[(T - 1 - t) * B:(T - t) * B, :] = h[:, H:]    # bwd @ T-1-t

        # --- linear head: split-weight partial matmuls (no concat relayout),
        #     lane-dense padded output ---
        out = (jnp.dot(recf_ref[...].astype(wlf_ref.dtype), wlf_ref[...],
                       preferred_element_type=jnp.float32)
               + jnp.dot(recb_ref[...].astype(wlb_ref.dtype), wlb_ref[...],
                         preferred_element_type=jnp.float32)
               + bl_ref[...])
        out_ref[...] = out.astype(out_ref.dtype)

    vmem = pltpu.MemorySpace.VMEM
    out_flat = pl.pallas_call(
        kernel,
        out_shape=jax.ShapeDtypeStruct((T * B, O_pad), x.dtype),
        in_specs=[pl.BlockSpec(memory_space=vmem)] * 7,
        out_specs=pl.BlockSpec(memory_space=vmem),
        scratch_shapes=[
            pltpu.VMEM((T * B, 8 * H), jnp.float32),   # fused input-gate projections
            pltpu.VMEM((T * B, H), jnp.float32),       # fwd hidden states (f32)
            pltpu.VMEM((T * B, H), jnp.float32),       # bwd hidden states (f32)
        ],
    )(x_ext, w_ih_cat, w_hh_cat, b_cat, wl_f, wl_b, bl)

    out = out_flat.reshape(T, B, O_pad)[:, :, :O]       # drop lane padding
    return jnp.transpose(out, (1, 0, 2))                # -> [B, T, O]


# ----------------------------------------------------------------------------
# Pure-JAX reference (PyTorch LSTM semantics, gate order i,f,g,o)
# ----------------------------------------------------------------------------
def lstm_dir_ref(x, w_ih, w_hh, b, reverse):
    B, T, D = x.shape
    H = w_hh.shape[1]

    def step(carry, x_t):
        h, c = carry
        g = x_t @ w_ih.T + h @ w_hh.T + b
        i = jax.nn.sigmoid(g[:, :H])
        f = jax.nn.sigmoid(g[:, H:2 * H])
        gg = jnp.tanh(g[:, 2 * H:3 * H])
        o = jax.nn.sigmoid(g[:, 3 * H:])
        c = f * c + i * gg
        h = o * jnp.tanh(c)
        return (h, c), h

    xs = jnp.swapaxes(x, 0, 1)                  # [T, B, D]
    if reverse:
        xs = xs[::-1]
    init = (jnp.zeros((B, H), jnp.float32), jnp.zeros((B, H), jnp.float32))
    _, hs = jax.lax.scan(step, init, xs)
    if reverse:
        hs = hs[::-1]
    return jnp.swapaxes(hs, 0, 1)               # [B, T, H]


def bilstm_ref(x, p):
    fwd = lstm_dir_ref(x, p["w_ih_f"], p["w_hh_f"], p["b_ih_f"] + p["b_hh_f"], False)
    bwd = lstm_dir_ref(x, p["w_ih_b"], p["w_hh_b"], p["b_ih_b"] + p["b_hh_b"], True)
    rec = jnp.concatenate([fwd, bwd], axis=-1)
    return rec @ p["w_lin"].T + p["b_lin"]


# ----------------------------------------------------------------------------
# Main
# ----------------------------------------------------------------------------
if __name__ == "__main__":
    B, T, D, H, O = 2, 8, 16, 32, 16

    key = jax.random.PRNGKey(0)
    ks = jax.random.split(key, 11)
    s = 1.0 / math.sqrt(H)

    def u(k, shape):
        return jax.random.uniform(k, shape, jnp.float32, minval=-s, maxval=s)

    params = {
        "w_ih_f": u(ks[0], (4 * H, D)),
        "w_hh_f": u(ks[1], (4 * H, H)),
        "b_ih_f": u(ks[2], (4 * H,)),
        "b_hh_f": u(ks[3], (4 * H,)),
        "w_ih_b": u(ks[4], (4 * H, D)),
        "w_hh_b": u(ks[5], (4 * H, H)),
        "b_ih_b": u(ks[6], (4 * H,)),
        "b_hh_b": u(ks[7], (4 * H,)),
        "w_lin":  u(ks[8], (O, 2 * H)),
        "b_lin":  u(ks[9], (O,)),
    }

    x = jax.random.normal(ks[10], (B, T, D), jnp.float32)

    out = jax.block_until_ready(bilstm_forward(x, params))
    ref = jax.block_until_ready(bilstm_ref(x, params))

    assert out.shape == (B, T, O), out.shape
    # bf16 MXU operands with f32 accumulation/state -> slightly looser tolerance.
    assert jnp.allclose(out, ref, atol=3e-2, rtol=3e-2), "mismatch vs reference"

    print("KERNEL_OK")
</pallas_src>

<mosaic_0001>
module attributes {stable_mosaic.version = 11 : i64} {
  func.func @kernel(%arg0: memref<16x32xbf16, #tpu.memory_space<vmem>>, %arg1: memref<32x256xbf16, #tpu.memory_space<vmem>>, %arg2: memref<64x256xbf16, #tpu.memory_space<vmem>>, %arg3: memref<1x256xf32, #tpu.memory_space<vmem>>, %arg4: memref<32x128xbf16, #tpu.memory_space<vmem>>, %arg5: memref<32x128xbf16, #tpu.memory_space<vmem>>, %arg6: memref<1x128xf32, #tpu.memory_space<vmem>>, %arg7: memref<16x128xf32, #tpu.memory_space<vmem>>, %arg8: memref<16x256xf32, #tpu.memory_space<vmem>>, %arg9: memref<16x32xf32, #tpu.memory_space<vmem>>, %arg10: memref<16x32xf32, #tpu.memory_space<vmem>>) attributes {dimension_semantics = [], scalar_prefetch = 0 : i64, scratch_operands = 3 : i64, tpu.core_type = #tpu.core_type<tc>} {
    %c0 = arith.constant 0 : index
    %c0_0 = arith.constant 0 : index
    %0 = vector.load %arg0[%c0, %c0_0] : memref<16x32xbf16, #tpu.memory_space<vmem>>, vector<16x32xbf16>
    %c0_1 = arith.constant 0 : index
    %c0_2 = arith.constant 0 : index
    %1 = vector.load %arg1[%c0_1, %c0_2] : memref<32x256xbf16, #tpu.memory_space<vmem>>, vector<32x256xbf16>
    %cst = arith.constant dense<0.000000e+00> : vector<16x256xf32>
    %2 = tpu.matmul %0, %1, %cst {dimension_numbers = #tpu.dot_dimension_numbers<[1], [0], [0], [1], [0, 0, 1, 1], [], []>} : vector<16x32xbf16>, vector<32x256xbf16>, vector<16x256xf32> -> vector<16x256xf32>
    %c0_3 = arith.constant 0 : index
    %c0_4 = arith.constant 0 : index
    %3 = vector.load %arg3[%c0_3, %c0_4] : memref<1x256xf32, #tpu.memory_space<vmem>>, vector<1x256xf32>
    %4 = vector.broadcast %3 : vector<1x256xf32> to vector<16x256xf32>
    %5 = arith.addf %2, %4 : vector<16x256xf32>
    %c0_5 = arith.constant 0 : index
    %c0_6 = arith.constant 0 : index
    %6 = vector.load %arg8[%c0_5, %c0_6] : memref<16x256xf32, #tpu.memory_space<vmem>>, vector<16x256xf32>
    tpu.vector_store %arg8[%c0_5, %c0_6], %5 {strides = array<i32>} : memref<16x256xf32, #tpu.memory_space<vmem>>, vector<16x256xf32>,
    %c0_7 = arith.constant 0 : index
    %c0_8 = arith.constant 0 : index
    %7 = vector.load %arg2[%c0_7, %c0_8] : memref<64x256xbf16, #tpu.memory_space<vmem>>, vector<64x256xbf16>
    %cst_9 = arith.constant 0.000000e+00 : f32
    %8 = vector.broadcast %cst_9 : f32 to vector<2x64xf32>
    %cst_10 = arith.constant 0.000000e+00 : f32
    %9 = vector.broadcast %cst_10 : f32 to vector<2x64xf32>
    %c0_11 = arith.constant 0 : index
    %c0_12 = arith.constant 0 : index
    %10 = vector.load %arg8[%c0_11, %c0_12] : memref<16x256xf32, #tpu.memory_space<vmem>>, vector<2x256xf32>
    %11 = arith.truncf %8 : vector<2x64xf32> to vector<2x64xbf16>
    %cst_13 = arith.constant dense<0.000000e+00> : vector<2x256xf32>
    %12 = tpu.matmul %11, %7, %cst_13 {dimension_numbers = #tpu.dot_dimension_numbers<[1], [0], [0], [1], [0, 0, 1, 1], [], []>} : vector<2x64xbf16>, vector<64x256xbf16>, vector<2x256xf32> -> vector<2x256xf32>
    %13 = arith.addf %10, %12 : vector<2x256xf32>
    %14 = arith.negf %13 : vector<2x256xf32>
    %15 = math.exp %14 : vector<2x256xf32>
    %cst_14 = arith.constant 1.000000e+00 : f32
    %16 = vector.broadcast %cst_14 : f32 to vector<2x256xf32>
    %17 = arith.addf %16, %15 : vector<2x256xf32>
    %18 = arith.divf %16, %17 : vector<2x256xf32>
    %19 = math.tanh %13 : vector<2x256xf32>
    %20 = vector.extract_strided_slice %18 {offsets = [0, 0], sizes = [2, 64], strides = [1, 1]} : vector<2x256xf32> to vector<2x64xf32>
    %21 = vector.extract_strided_slice %18 {offsets = [0, 64], sizes = [2, 64], strides = [1, 1]} : vector<2x256xf32> to vector<2x64xf32>
    %22 = vector.extract_strided_slice %19 {offsets = [0, 128], sizes = [2, 64], strides = [1, 1]} : vector<2x256xf32> to vector<2x64xf32>
    %23 = vector.extract_strided_slice %18 {offsets = [0, 192], sizes = [2, 64], strides = [1, 1]} : vector<2x256xf32> to vector<2x64xf32>
    %24 = arith.mulf %21, %9 : vector<2x64xf32>
    %25 = arith.mulf %20, %22 : vector<2x64xf32>
    %26 = arith.addf %24, %25 : vector<2x64xf32>
    %27 = math.tanh %26 : vector<2x64xf32>
    %28 = arith.mulf %23, %27 : vector<2x64xf32>
    %29 = vector.extract_strided_slice %28 {offsets = [0, 0], sizes = [2, 32], strides = [1, 1]} : vector<2x64xf32> to vector<2x32xf32>
    %c0_15 = arith.constant 0 : index
    %c0_16 = arith.constant 0 : index
    %30 = vector.load %arg9[%c0_15, %c0_16] : memref<16x32xf32, #tpu.memory_space<vmem>>, vector<2x32xf32>
    tpu.vector_store %arg9[%c0_15, %c0_16], %29 {strides = array<i32>} : memref<16x32xf32, #tpu.memory_space<vmem>>, vector<2x32xf32>,
    %31 = vector.extract_strided_slice %28 {offsets = [0, 32], sizes = [2, 32], strides = [1, 1]} : vector<2x64xf32> to vector<2x32xf32>
    %c14 = arith.constant 14 : index
    %c0_17 = arith.constant 0 : index
    %32 = vector.load %arg10[%c14, %c0_17] : memref<16x32xf32, #tpu.memory_space<vmem>>, vector<2x32xf32>
    tpu.vector_store %arg10[%c14, %c0_17], %31 {strides = array<i32>} : memref<16x32xf32, #tpu.memory_space<vmem>>, vector<2x32xf32>,
    %c2 = arith.constant 2 : index
    %c0_18 = arith.constant 0 : index
    %33 = vector.load %arg8[%c2, %c0_18] : memref<16x256xf32, #tpu.memory_space<vmem>>, vector<2x256xf32>
    %34 = arith.truncf %28 : vector<2x64xf32> to vector<2x64xbf16>
    %cst_19 = arith.constant dense<0.000000e+00> : vector<2x256xf32>
    %35 = tpu.matmul %34, %7, %cst_19 {dimension_numbers = #tpu.dot_dimension_numbers<[1], [0], [0], [1], [0, 0, 1, 1], [], []>} : vector<2x64xbf16>, vector<64x256xbf16>, vector<2x256xf32> -> vector<2x256xf32>
    %36 = arith.addf %33, %35 : vector<2x256xf32>
    %37 = arith.negf %36 : vector<2x256xf32>
    %38 = math.exp %37 : vector<2x256xf32>
    %cst_20 = arith.constant 1.000000e+00 : f32
    %39 = vector.broadcast %cst_20 : f32 to vector<2x256xf32>
    %40 = arith.addf %39, %38 : vector<2x256xf32>
    %41 = arith.divf %39, %40 : vector<2x256xf32>
    %42 = math.tanh %36 : vector<2x256xf32>
    %43 = vector.extract_strided_slice %41 {offsets = [0, 0], sizes = [2, 64], strides = [1, 1]} : vector<2x256xf32> to vector<2x64xf32>
    %44 = vector.extract_strided_slice %41 {offsets = [0, 64], sizes = [2, 64], strides = [1, 1]} : vector<2x256xf32> to vector<2x64xf32>
    %45 = vector.extract_strided_slice %42 {offsets = [0, 128], sizes = [2, 64], strides = [1, 1]} : vector<2x256xf32> to vector<2x64xf32>
    %46 = vector.extract_strided_slice %41 {offsets = [0, 192], sizes = [2, 64], strides = [1, 1]} : vector<2x256xf32> to vector<2x64xf32>
    %47 = arith.mulf %44, %26 : vector<2x64xf32>
    %48 = arith.mulf %43, %45 : vector<2x64xf32>
    %49 = arith.addf %47, %48 : vector<2x64xf32>
    %50 = math.tanh %49 : vector<2x64xf32>
    %51 = arith.mulf %46, %50 : vector<2x64xf32>
    %52 = vector.extract_strided_slice %51 {offsets = [0, 0], sizes = [2, 32], strides = [1, 1]} : vector<2x64xf32> to vector<2x32xf32>
    %c2_21 = arith.constant 2 : index
    %c0_22 = arith.constant 0 : index
    %53 = vector.load %arg9[%c2_21, %c0_22] : memref<16x32xf32, #tpu.memory_space<vmem>>, vector<2x32xf32>
    tpu.vector_store %arg9[%c2_21, %c0_22], %52 {strides = array<i32>} : memref<16x32xf32, #tpu.memory_space<vmem>>, vector<2x32xf32>,
    %54 = vector.extract_strided_slice %51 {offsets = [0, 32], sizes = [2, 32], strides = [1, 1]} : vector<2x64xf32> to vector<2x32xf32>
    %c12 = arith.constant 12 : index
    %c0_23 = arith.constant 0 : index
    %55 = vector.load %arg10[%c12, %c0_23] : memref<16x32xf32, #tpu.memory_space<vmem>>, vector<2x32xf32>
    tpu.vector_store %arg10[%c12, %c0_23], %54 {strides = array<i32>} : memref<16x32xf32, #tpu.memory_space<vmem>>, vector<2x32xf32>,
    %c4 = arith.constant 4 : index
    %c0_24 = arith.constant 0 : index
    %56 = vector.load %arg8[%c4, %c0_24] : memref<16x256xf32, #tpu.memory_space<vmem>>, vector<2x256xf32>
    %57 = arith.truncf %51 : vector<2x64xf32> to vector<2x64xbf16>
    %cst_25 = arith.constant dense<0.000000e+00> : vector<2x256xf32>
    %58 = tpu.matmul %57, %7, %cst_25 {dimension_numbers = #tpu.dot_dimension_numbers<[1], [0], [0], [1], [0, 0, 1, 1], [], []>} : vector<2x64xbf16>, vector<64x256xbf16>, vector<2x256xf32> -> vector<2x256xf32>
    %59 = arith.addf %56, %58 : vector<2x256xf32>
    %60 = arith.negf %59 : vector<2x256xf32>
    %61 = math.exp %60 : vector<2x256xf32>
    %cst_26 = arith.constant 1.000000e+00 : f32
    %62 = vector.broadcast %cst_26 : f32 to vector<2x256xf32>
    %63 = arith.addf %62, %61 : vector<2x256xf32>
    %64 = arith.divf %62, %63 : vector<2x256xf32>
    %65 = math.tanh %59 : vector<2x256xf32>
    %66 = vector.extract_strided_slice %64 {offsets = [0, 0], sizes = [2, 64], strides = [1, 1]} : vector<2x256xf32> to vector<2x64xf32>
    %67 = vector.extract_strided_slice %64 {offsets = [0, 64], sizes = [2, 64], strides = [1, 1]} : vector<2x256xf32> to vector<2x64xf32>
    %68 = vector.extract_strided_slice %65 {offsets = [0, 128], sizes = [2, 64], strides = [1, 1]} : vector<2x256xf32> to vector<2x64xf32>
    %69 = vector.extract_strided_slice %64 {offsets = [0, 192], sizes = [2, 64], strides = [1, 1]} : vector<2x256xf32> to vector<2x64xf32>
    %70 = arith.mulf %67, %49 : vector<2x64xf32>
    %71 = arith.mulf %66, %68 : vector<2x64xf32>
    %72 = arith.addf %70, %71 : vector<2x64xf32>
    %73 = math.tanh %72 : vector<2x64xf32>
    %74 = arith.mulf %69, %73 : vector<2x64xf32>
    %75 = vector.extract_strided_slice %74 {offsets = [0, 0], sizes = [2, 32], strides = [1, 1]} : vector<2x64xf32> to vector<2x32xf32>
    %c4_27 = arith.constant 4 : index
    %c0_28 = arith.constant 0 : index
    %76 = vector.load %arg9[%c4_27, %c0_28] : memref<16x32xf32, #tpu.memory_space<vmem>>, vector<2x32xf32>
    tpu.vector_store %arg9[%c4_27, %c0_28], %75 {strides = array<i32>} : memref<16x32xf32, #tpu.memory_space<vmem>>, vector<2x32xf32>,
    %77 = vector.extract_strided_slice %74 {offsets = [0, 32], sizes = [2, 32], strides = [1, 1]} : vector<2x64xf32> to vector<2x32xf32>
    %c10 = arith.constant 10 : index
    %c0_29 = arith.constant 0 : index
    %78 = vector.load %arg10[%c10, %c0_29] : memref<16x32xf32, #tpu.memory_space<vmem>>, vector<2x32xf32>
    tpu.vector_store %arg10[%c10, %c0_29], %77 {strides = array<i32>} : memref<16x32xf32, #tpu.memory_space<vmem>>, vector<2x32xf32>,
    %c6 = arith.constant 6 : index
    %c0_30 = arith.constant 0 : index
    %79 = vector.load %arg8[%c6, %c0_30] : memref<16x256xf32, #tpu.memory_space<vmem>>, vector<2x256xf32>
    %80 = arith.truncf %74 : vector<2x64xf32> to vector<2x64xbf16>
    %cst_31 = arith.constant dense<0.000000e+00> : vector<2x256xf32>
    %81 = tpu.matmul %80, %7, %cst_31 {dimension_numbers = #tpu.dot_dimension_numbers<[1], [0], [0], [1], [0, 0, 1, 1], [], []>} : vector<2x64xbf16>, vector<64x256xbf16>, vector<2x256xf32> -> vector<2x256xf32>
    %82 = arith.addf %79, %81 : vector<2x256xf32>
    %83 = arith.negf %82 : vector<2x256xf32>
    %84 = math.exp %83 : vector<2x256xf32>
    %cst_32 = arith.constant 1.000000e+00 : f32
    %85 = vector.broadcast %cst_32 : f32 to vector<2x256xf32>
    %86 = arith.addf %85, %84 : vector<2x256xf32>
    %87 = arith.divf %85, %86 : vector<2x256xf32>
    %88 = math.tanh %82 : vector<2x256xf32>
    %89 = vector.extract_strided_slice %87 {offsets = [0, 0], sizes = [2, 64], strides = [1, 1]} : vector<2x256xf32> to vector<2x64xf32>
    %90 = vector.extract_strided_slice %87 {offsets = [0, 64], sizes = [2, 64], strides = [1, 1]} : vector<2x256xf32> to vector<2x64xf32>
    %91 = vector.extract_strided_slice %88 {offsets = [0, 128], sizes = [2, 64], strides = [1, 1]} : vector<2x256xf32> to vector<2x64xf32>
    %92 = vector.extract_strided_slice %87 {offsets = [0, 192], sizes = [2, 64], strides = [1, 1]} : vector<2x256xf32> to vector<2x64xf32>
    %93 = arith.mulf %90, %72 : vector<2x64xf32>
    %94 = arith.mulf %89, %91 : vector<2x64xf32>
    %95 = arith.addf %93, %94 : vector<2x64xf32>
    %96 = math.tanh %95 : vector<2x64xf32>
    %97 = arith.mulf %92, %96 : vector<2x64xf32>
    %98 = vector.extract_strided_slice %97 {offsets = [0, 0], sizes = [2, 32], strides = [1, 1]} : vector<2x64xf32> to vector<2x32xf32>
    %c6_33 = arith.constant 6 : index
    %c0_34 = arith.constant 0 : index
    %99 = vector.load %arg9[%c6_33, %c0_34] : memref<16x32xf32, #tpu.memory_space<vmem>>, vector<2x32xf32>
    tpu.vector_store %arg9[%c6_33, %c0_34], %98 {strides = array<i32>} : memref<16x32xf32, #tpu.memory_space<vmem>>, vector<2x32xf32>,
    %100 = vector.extract_strided_slice %97 {offsets = [0, 32], sizes = [2, 32], strides = [1, 1]} : vector<2x64xf32> to vector<2x32xf32>
    %c8 = arith.constant 8 : index
    %c0_35 = arith.constant 0 : index
    %101 = vector.load %arg10[%c8, %c0_35] : memref<16x32xf32, #tpu.memory_space<vmem>>, vector<2x32xf32>
    tpu.vector_store %arg10[%c8, %c0_35], %100 {strides = array<i32>} : memref<16x32xf32, #tpu.memory_space<vmem>>, vector<2x32xf32>,
    %c8_36 = arith.constant 8 : index
    %c0_37 = arith.constant 0 : index
    %102 = vector.load %arg8[%c8_36, %c0_37] : memref<16x256xf32, #tpu.memory_space<vmem>>, vector<2x256xf32>
    %103 = arith.truncf %97 : vector<2x64xf32> to vector<2x64xbf16>
    %cst_38 = arith.constant dense<0.000000e+00> : vector<2x256xf32>
    %104 = tpu.matmul %103, %7, %cst_38 {dimension_numbers = #tpu.dot_dimension_numbers<[1], [0], [0], [1], [0, 0, 1, 1], [], []>} : vector<2x64xbf16>, vector<64x256xbf16>, vector<2x256xf32> -> vector<2x256xf32>
    %105 = arith.addf %102, %104 : vector<2x256xf32>
    %106 = arith.negf %105 : vector<2x256xf32>
    %107 = math.exp %106 : vector<2x256xf32>
    %cst_39 = arith.constant 1.000000e+00 : f32
    %108 = vector.broadcast %cst_39 : f32 to vector<2x256xf32>
    %109 = arith.addf %108, %107 : vector<2x256xf32>
    %110 = arith.divf %108, %109 : vector<2x256xf32>
    %111 = math.tanh %105 : vector<2x256xf32>
    %112 = vector.extract_strided_slice %110 {offsets = [0, 0], sizes = [2, 64], strides = [1, 1]} : vector<2x256xf32> to vector<2x64xf32>
    %113 = vector.extract_strided_slice %110 {offsets = [0, 64], sizes = [2, 64], strides = [1, 1]} : vector<2x256xf32> to vector<2x64xf32>
    %114 = vector.extract_strided_slice %111 {offsets = [0, 128], sizes = [2, 64], strides = [1, 1]} : vector<2x256xf32> to vector<2x64xf32>
    %115 = vector.extract_strided_slice %110 {offsets = [0, 192], sizes = [2, 64], strides = [1, 1]} : vector<2x256xf32> to vector<2x64xf32>
    %116 = arith.mulf %113, %95 : vector<2x64xf32>
    %117 = arith.mulf %112, %114 : vector<2x64xf32>
    %118 = arith.addf %116, %117 : vector<2x64xf32>
    %119 = math.tanh %118 : vector<2x64xf32>
    %120 = arith.mulf %115, %119 : vector<2x64xf32>
    %121 = vector.extract_strided_slice %120 {offsets = [0, 0], sizes = [2, 32], strides = [1, 1]} : vector<2x64xf32> to vector<2x32xf32>
    %c8_40 = arith.constant 8 : index
    %c0_41 = arith.constant 0 : index
    %122 = vector.load %arg9[%c8_40, %c0_41] : memref<16x32xf32, #tpu.memory_space<vmem>>, vector<2x32xf32>
    tpu.vector_store %arg9[%c8_40, %c0_41], %121 {strides = array<i32>} : memref<16x32xf32, #tpu.memory_space<vmem>>, vector<2x32xf32>,
    %123 = vector.extract_strided_slice %120 {offsets = [0, 32], sizes = [2, 32], strides = [1, 1]} : vector<2x64xf32> to vector<2x32xf32>
    %c6_42 = arith.constant 6 : index
    %c0_43 = arith.constant 0 : index
    %124 = vector.load %arg10[%c6_42, %c0_43] : memref<16x32xf32, #tpu.memory_space<vmem>>, vector<2x32xf32>
    tpu.vector_store %arg10[%c6_42, %c0_43], %123 {strides = array<i32>} : memref<16x32xf32, #tpu.memory_space<vmem>>, vector<2x32xf32>,
    %c10_44 = arith.constant 10 : index
    %c0_45 = arith.constant 0 : index
    %125 = vector.load %arg8[%c10_44, %c0_45] : memref<16x256xf32, #tpu.memory_space<vmem>>, vector<2x256xf32>
    %126 = arith.truncf %120 : vector<2x64xf32> to vector<2x64xbf16>
    %cst_46 = arith.constant dense<0.000000e+00> : vector<2x256xf32>
    %127 = tpu.matmul %126, %7, %cst_46 {dimension_numbers = #tpu.dot_dimension_numbers<[1], [0], [0], [1], [0, 0, 1, 1], [], []>} : vector<2x64xbf16>, vector<64x256xbf16>, vector<2x256xf32> -> vector<2x256xf32>
    %128 = arith.addf %125, %127 : vector<2x256xf32>
    %129 = arith.negf %128 : vector<2x256xf32>
    %130 = math.exp %129 : vector<2x256xf32>
    %cst_47 = arith.constant 1.000000e+00 : f32
    %131 = vector.broadcast %cst_47 : f32 to vector<2x256xf32>
    %132 = arith.addf %131, %130 : vector<2x256xf32>
    %133 = arith.divf %131, %132 : vector<2x256xf32>
    %134 = math.tanh %128 : vector<2x256xf32>
    %135 = vector.extract_strided_slice %133 {offsets = [0, 0], sizes = [2, 64], strides = [1, 1]} : vector<2x256xf32> to vector<2x64xf32>
    %136 = vector.extract_strided_slice %133 {offsets = [0, 64], sizes = [2, 64], strides = [1, 1]} : vector<2x256xf32> to vector<2x64xf32>
    %137 = vector.extract_strided_slice %134 {offsets = [0, 128], sizes = [2, 64], strides = [1, 1]} : vector<2x256xf32> to vector<2x64xf32>
    %138 = vector.extract_strided_slice %133 {offsets = [0, 192], sizes = [2, 64], strides = [1, 1]} : vector<2x256xf32> to vector<2x64xf32>
    %139 = arith.mulf %136, %118 : vector<2x64xf32>
    %140 = arith.mulf %135, %137 : vector<2x64xf32>
    %141 = arith.addf %139, %140 : vector<2x64xf32>
    %142 = math.tanh %141 : vector<2x64xf32>
    %143 = arith.mulf %138, %142 : vector<2x64xf32>
    %144 = vector.extract_strided_slice %143 {offsets = [0, 0], sizes = [2, 32], strides = [1, 1]} : vector<2x64xf32> to vector<2x32xf32>
    %c10_48 = arith.constant 10 : index
    %c0_49 = arith.constant 0 : index
    %145 = vector.load %arg9[%c10_48, %c0_49] : memref<16x32xf32, #tpu.memory_space<vmem>>, vector<2x32xf32>
    tpu.vector_store %arg9[%c10_48, %c0_49], %144 {strides = array<i32>} : memref<16x32xf32, #tpu.memory_space<vmem>>, vector<2x32xf32>,
    %146 = vector.extract_strided_slice %143 {offsets = [0, 32], sizes = [2, 32], strides = [1, 1]} : vector<2x64xf32> to vector<2x32xf32>
    %c4_50 = arith.constant 4 : index
    %c0_51 = arith.constant 0 : index
    %147 = vector.load %arg10[%c4_50, %c0_51] : memref<16x32xf32, #tpu.memory_space<vmem>>, vector<2x32xf32>
    tpu.vector_store %arg10[%c4_50, %c0_51], %146 {strides = array<i32>} : memref<16x32xf32, #tpu.memory_space<vmem>>, vector<2x32xf32>,
    %c12_52 = arith.constant 12 : index
    %c0_53 = arith.constant 0 : index
    %148 = vector.load %arg8[%c12_52, %c0_53] : memref<16x256xf32, #tpu.memory_space<vmem>>, vector<2x256xf32>
    %149 = arith.truncf %143 : vector<2x64xf32> to vector<2x64xbf16>
    %cst_54 = arith.constant dense<0.000000e+00> : vector<2x256xf32>
    %150 = tpu.matmul %149, %7, %cst_54 {dimension_numbers = #tpu.dot_dimension_numbers<[1], [0], [0], [1], [0, 0, 1, 1], [], []>} : vector<2x64xbf16>, vector<64x256xbf16>, vector<2x256xf32> -> vector<2x256xf32>
    %151 = arith.addf %148, %150 : vector<2x256xf32>
    %152 = arith.negf %151 : vector<2x256xf32>
    %153 = math.exp %152 : vector<2x256xf32>
    %cst_55 = arith.constant 1.000000e+00 : f32
    %154 = vector.broadcast %cst_55 : f32 to vector<2x256xf32>
    %155 = arith.addf %154, %153 : vector<2x256xf32>
    %156 = arith.divf %154, %155 : vector<2x256xf32>
    %157 = math.tanh %151 : vector<2x256xf32>
    %158 = vector.extract_strided_slice %156 {offsets = [0, 0], sizes = [2, 64], strides = [1, 1]} : vector<2x256xf32> to vector<2x64xf32>
    %159 = vector.extract_strided_slice %156 {offsets = [0, 64], sizes = [2, 64], strides = [1, 1]} : vector<2x256xf32> to vector<2x64xf32>
    %160 = vector.extract_strided_slice %157 {offsets = [0, 128], sizes = [2, 64], strides = [1, 1]} : vector<2x256xf32> to vector<2x64xf32>
    %161 = vector.extract_strided_slice %156 {offsets = [0, 192], sizes = [2, 64], strides = [1, 1]} : vector<2x256xf32> to vector<2x64xf32>
    %162 = arith.mulf %159, %141 : vector<2x64xf32>
    %163 = arith.mulf %158, %160 : vector<2x64xf32>
    %164 = arith.addf %162, %163 : vector<2x64xf32>
    %165 = math.tanh %164 : vector<2x64xf32>
    %166 = arith.mulf %161, %165 : vector<2x64xf32>
    %167 = vector.extract_strided_slice %166 {offsets = [0, 0], sizes = [2, 32], strides = [1, 1]} : vector<2x64xf32> to vector<2x32xf32>
    %c12_56 = arith.constant 12 : index
    %c0_57 = arith.constant 0 : index
    %168 = vector.load %arg9[%c12_56, %c0_57] : memref<16x32xf32, #tpu.memory_space<vmem>>, vector<2x32xf32>
    tpu.vector_store %arg9[%c12_56, %c0_57], %167 {strides = array<i32>} : memref<16x32xf32, #tpu.memory_space<vmem>>, vector<2x32xf32>,
    %169 = vector.extract_strided_slice %166 {offsets = [0, 32], sizes = [2, 32], strides = [1, 1]} : vector<2x64xf32> to vector<2x32xf32>
    %c2_58 = arith.constant 2 : index
    %c0_59 = arith.constant 0 : index
    %170 = vector.load %arg10[%c2_58, %c0_59] : memref<16x32xf32, #tpu.memory_space<vmem>>, vector<2x32xf32>
    tpu.vector_store %arg10[%c2_58, %c0_59], %169 {strides = array<i32>} : memref<16x32xf32, #tpu.memory_space<vmem>>, vector<2x32xf32>,
    %c14_60 = arith.constant 14 : index
    %c0_61 = arith.constant 0 : index
    %171 = vector.load %arg8[%c14_60, %c0_61] : memref<16x256xf32, #tpu.memory_space<vmem>>, vector<2x256xf32>
    %172 = arith.truncf %166 : vector<2x64xf32> to vector<2x64xbf16>
    %cst_62 = arith.constant dense<0.000000e+00> : vector<2x256xf32>
    %173 = tpu.matmul %172, %7, %cst_62 {dimension_numbers = #tpu.dot_dimension_numbers<[1], [0], [0], [1], [0, 0, 1, 1], [], []>} : vector<2x64xbf16>, vector<64x256xbf16>, vector<2x256xf32> -> vector<2x256xf32>
    %174 = arith.addf %171, %173 : vector<2x256xf32>
    %175 = arith.negf %174 : vector<2x256xf32>
    %176 = math.exp %175 : vector<2x256xf32>
    %cst_63 = arith.constant 1.000000e+00 : f32
    %177 = vector.broadcast %cst_63 : f32 to vector<2x256xf32>
    %178 = arith.addf %177, %176 : vector<2x256xf32>
    %179 = arith.divf %177, %178 : vector<2x256xf32>
    %180 = math.tanh %174 : vector<2x256xf32>
    %181 = vector.extract_strided_slice %179 {offsets = [0, 0], sizes = [2, 64], strides = [1, 1]} : vector<2x256xf32> to vector<2x64xf32>
    %182 = vector.extract_strided_slice %179 {offsets = [0, 64], sizes = [2, 64], strides = [1, 1]} : vector<2x256xf32> to vector<2x64xf32>
    %183 = vector.extract_strided_slice %180 {offsets = [0, 128], sizes = [2, 64], strides = [1, 1]} : vector<2x256xf32> to vector<2x64xf32>
    %184 = vector.extract_strided_slice %179 {offsets = [0, 192], sizes = [2, 64], strides = [1, 1]} : vector<2x256xf32> to vector<2x64xf32>
    %185 = arith.mulf %182, %164 : vector<2x64xf32>
    %186 = arith.mulf %181, %183 : vector<2x64xf32>
    %187 = arith.addf %185, %186 : vector<2x64xf32>
    %188 = math.tanh %187 : vector<2x64xf32>
    %189 = arith.mulf %184, %188 : vector<2x64xf32>
    %190 = vector.extract_strided_slice %189 {offsets = [0, 0], sizes = [2, 32], strides = [1, 1]} : vector<2x64xf32> to vector<2x32xf32>
    %c14_64 = arith.constant 14 : index
    %c0_65 = arith.constant 0 : index
    %191 = vector.load %arg9[%c14_64, %c0_65] : memref<16x32xf32, #tpu.memory_space<vmem>>, vector<2x32xf32>
    tpu.vector_store %arg9[%c14_64, %c0_65], %190 {strides = array<i32>} : memref<16x32xf32, #tpu.memory_space<vmem>>, vector<2x32xf32>,
    %192 = vector.extract_strided_slice %189 {offsets = [0, 32], sizes = [2, 32], strides = [1, 1]} : vector<2x64xf32> to vector<2x32xf32>
    %c0_66 = arith.constant 0 : index
    %c0_67 = arith.constant 0 : index
    %193 = vector.load %arg10[%c0_66, %c0_67] : memref<16x32xf32, #tpu.memory_space<vmem>>, vector<2x32xf32>
    tpu.vector_store %arg10[%c0_66, %c0_67], %192 {strides = array<i32>} : memref<16x32xf32, #tpu.memory_space<vmem>>, vector<2x32xf32>,
    %c0_68 = arith.constant 0 : index
    %c0_69 = arith.constant 0 : index
    %194 = vector.load %arg9[%c0_68, %c0_69] : memref<16x32xf32, #tpu.memory_space<vmem>>, vector<16x32xf32>
    %195 = arith.truncf %194 : vector<16x32xf32> to vector<16x32xbf16>
    %c0_70 = arith.constant 0 : index
    %c0_71 = arith.constant 0 : index
    %196 = vector.load %arg4[%c0_70, %c0_71] : memref<32x128xbf16, #tpu.memory_space<vmem>>, vector<32x128xbf16>
    %cst_72 = arith.constant dense<0.000000e+00> : vector<16x128xf32>
    %197 = tpu.matmul %195, %196, %cst_72 {dimension_numbers = #tpu.dot_dimension_numbers<[1], [0], [0], [1], [0, 0, 1, 1], [], []>} : vector<16x32xbf16>, vector<32x128xbf16>, vector<16x128xf32> -> vector<16x128xf32>
    %c0_73 = arith.constant 0 : index
    %c0_74 = arith.constant 0 : index
    %198 = vector.load %arg10[%c0_73, %c0_74] : memref<16x32xf32, #tpu.memory_space<vmem>>, vector<16x32xf32>
    %199 = arith.truncf %198 : vector<16x32xf32> to vector<16x32xbf16>
    %c0_75 = arith.constant 0 : index
    %c0_76 = arith.constant 0 : index
    %200 = vector.load %arg5[%c0_75, %c0_76] : memref<32x128xbf16, #tpu.memory_space<vmem>>, vector<32x128xbf16>
    %cst_77 = arith.constant dense<0.000000e+00> : vector<16x128xf32>
    %201 = tpu.matmul %199, %200, %cst_77 {dimension_numbers = #tpu.dot_dimension_numbers<[1], [0], [0], [1], [0, 0, 1, 1], [], []>} : vector<16x32xbf16>, vector<32x128xbf16>, vector<16x128xf32> -> vector<16x128xf32>
    %202 = arith.addf %197, %201 : vector<16x128xf32>
    %c0_78 = arith.constant 0 : index
    %c0_79 = arith.constant 0 : index
    %203 = vector.load %arg6[%c0_78, %c0_79] : memref<1x128xf32, #tpu.memory_space<vmem>>, vector<1x128xf32>
    %204 = vector.broadcast %203 : vector<1x128xf32> to vector<16x128xf32>
    %205 = arith.addf %202, %204 : vector<16x128xf32>
    %c0_80 = arith.constant 0 : index
    %c0_81 = arith.constant 0 : index
    %206 = vector.load %arg7[%c0_80, %c0_81] : memref<16x128xf32, #tpu.memory_space<vmem>>, vector<16x128xf32>
    tpu.vector_store %arg7[%c0_80, %c0_81], %205 {strides = array<i32>} : memref<16x128xf32, #tpu.memory_space<vmem>>, vector<16x128xf32>,
    return
  }
}

</mosaic_0001>

<llo_original>
// kernel: tpu_custom_call.1
$region0: #{tpu_custom_call.1}
  #allocation0 [shape = 'u32[]', space=smem, size = 0x4, offset = 0x4, fixed_abs, tag = 'smem constant byte address 0x4 - core index']
  #allocation1 [shape = 'u32[144,128]{1,0:T(1,128)}', space=vmem, size = 0x12000, scoped, tag = 'internal scratch']
  #allocation2 [shape = 'f32[16,256]{1,0:T(8,128)}', space=vmem, size = 0x4000, scoped, tag = 'scratch operand']
  #allocation3 [shape = 'f32[16,32]{1,0:T(8,128)}', space=vmem, size = 0x2000, scoped, tag = 'scratch operand']
  #allocation4 [shape = 'f32[16,32]{1,0:T(8,128)}', space=vmem, size = 0x2000, scoped, tag = 'scratch operand']
  %s0 = inlined_call_operand.hbm [shape: bf16[16,32], index: 0, kind: input, shape index: {}]
  %s1 = inlined_call_operand.hbm [shape: bf16[32,256], index: 1, kind: input, shape index: {}]
  %s2 = inlined_call_operand.hbm [shape: bf16[64,256], index: 2, kind: input, shape index: {}]
  %s3 = inlined_call_operand.vmem [shape: f32[1,256], index: 3, kind: input, shape index: {}]
  %s4 = inlined_call_operand.hbm [shape: bf16[32,128], index: 4, kind: input, shape index: {}]
  %s5 = inlined_call_operand.vmem [shape: bf16[32,128], index: 5, kind: input, shape index: {}]
  %s6 = inlined_call_operand.vmem [shape: f32[1,128], index: 6, kind: input, shape index: {}]
  %s7 = inlined_call_operand.hbm [shape: f32[16,128], index: 7, kind: output, shape index: {}]
  %s8 = sld [smem:[#allocation0]]
  $region54: #{tpu_custom_call.1} parent=0
    _
  %s10 = ssub.s32 1, %s8
  %s11 = scalar_select 0, %s10, %s8
  $region1: #{tpu_custom_call.1} parent=0
    #allocation5 [shape = 'u8[4096]{0}', space=vmem, size = 0x1000, scoped, tag = 'input window, operand 0, single buffered']
    #allocation6 [shape = 's32[1]{0}', space=sflag, size = 0x4, scoped, tag = 'scoped memory for tpu_custom_call.1']
    #allocation7 [shape = 's32[1]{0}', space=sflag, size = 0x4, scoped, tag = 'scoped memory for tpu_custom_call.1']
    #allocation8 [shape = 'u8[16384]{0}', space=vmem, size = 0x4000, scoped, tag = 'input window, operand 1, single buffered']
    #allocation9 [shape = 's32[1]{0}', space=sflag, size = 0x4, scoped, tag = 'scoped memory for tpu_custom_call.1']
    #allocation10 [shape = 'u8[32768]{0}', space=vmem, size = 0x8000, scoped, tag = 'input window, operand 2, single buffered']
    #allocation11 [shape = 'u8[8192]{0}', space=vmem, size = 0x2000, scoped, tag = 'input window, operand 4, single buffered']
    #allocation12 [shape = 's32[1]{0}', space=sflag, size = 0x4, scoped, tag = 'scoped memory for tpu_custom_call.1']
    #allocation13 [shape = 'u8[8192]{0}', space=vmem, size = 0x2000, scoped, tag = 'output window, operand 0, single buffered']
    %12 = vsyncpa [#allocation6], 0
    %13 = vsyncpa [#allocation9], 0
    %14 = vsyncpa [#allocation12], 0
    %15 = vsyncpa [#allocation7], 0
    // Predicated region
    $region2: #{tpu_custom_call.1} parent=1 // pred_check
      _
    $region3: #{tpu_custom_call.1} parent=1 // pred_check_branch
      %17 = sbr.rel (0) target = $region5
    $region4: #{tpu_custom_call.1} parent=1 // pred_region
      %s19 = ssub.s32 128, 128
      %20 = vsyncadd [#allocation6], %s19
      %s21 = sshll.u32 [#allocation5], 4
      %s22 = int_to_ptr.vmem [resolvable:$true] %s21
      %27 = dma.hbm_to_vmem [thread:$0]  %s0, 128, %s22, [#allocation6], 64, 64, 4
    $region5: #{tpu_custom_call.1} parent=1 // pred_fallthru
      _
    // Predicated region
    $region6: #{tpu_custom_call.1} parent=1 // pred_check
      _
    $region7: #{tpu_custom_call.1} parent=1 // pred_check_branch
      %29 = sbr.rel (0) target = $region9
    $region8: #{tpu_custom_call.1} parent=1 // pred_region
      %s31 = ssub.s32 512, 512
      %32 = vsyncadd [#allocation9], %s31
      %s33 = sshll.u32 [#allocation8], 4
      %s34 = int_to_ptr.vmem [resolvable:$true] %s33
      %39 = dma.hbm_to_vmem [thread:$0]  %s1, 512, %s34, [#allocation9], 128, 128, 8
    $region9: #{tpu_custom_call.1} parent=1 // pred_fallthru
      _
    // Predicated region
    $region10: #{tpu_custom_call.1} parent=1 // pred_check
      _
    $region11: #{tpu_custom_call.1} parent=1 // pred_check_branch
      %41 = sbr.rel (0) target = $region13
    $region12: #{tpu_custom_call.1} parent=1 // pred_region
      %s43 = ssub.s32 1024, 1024
      %44 = vsyncadd [#allocation9], %s43
      %s45 = sshll.u32 [#allocation10], 4
      %s46 = int_to_ptr.vmem [resolvable:$true] %s45
      %51 = dma.hbm_to_vmem [thread:$0]  %s2, 1024, %s46, [#allocation9], 128, 128, 8
    $region13: #{tpu_custom_call.1} parent=1 // pred_fallthru
      _
    // Predicated region
    $region14: #{tpu_custom_call.1} parent=1 // pred_check
      _
    $region15: #{tpu_custom_call.1} parent=1 // pred_check_branch
      %53 = sbr.rel (0) target = $region17
    $region16: #{tpu_custom_call.1} parent=1 // pred_region
      _
    $region17: #{tpu_custom_call.1} parent=1 // pred_fallthru
      _
    // Predicated region
    $region18: #{tpu_custom_call.1} parent=1 // pred_check
      _
    $region19: #{tpu_custom_call.1} parent=1 // pred_check_branch
      %55 = sbr.rel (0) target = $region21
    $region20: #{tpu_custom_call.1} parent=1 // pred_region
      %s57 = ssub.s32 256, 256
      %58 = vsyncadd [#allocation12], %s57
      %s59 = sshll.u32 [#allocation11], 4
      %s60 = int_to_ptr.vmem [resolvable:$true] %s59
      %65 = dma.hbm_to_vmem [thread:$0]  %s4, 256, %s60, [#allocation12], 64, 64, 4
    $region21: #{tpu_custom_call.1} parent=1 // pred_fallthru
      _
    // Predicated region
    $region22: #{tpu_custom_call.1} parent=1 // pred_check
      _
    $region23: #{tpu_custom_call.1} parent=1 // pred_check_branch
      %67 = sbr.rel (0) target = $region25
    $region24: #{tpu_custom_call.1} parent=1 // pred_region
      _
    $region25: #{tpu_custom_call.1} parent=1 // pred_fallthru
      _
    // Predicated region
    $region26: #{tpu_custom_call.1} parent=1 // pred_check
      _
    $region27: #{tpu_custom_call.1} parent=1 // pred_check_branch
      %69 = sbr.rel (0) target = $region29
    $region28: #{tpu_custom_call.1} parent=1 // pred_region
      _
    $region29: #{tpu_custom_call.1} parent=1 // pred_fallthru
      _
    // Predicated region
    $region30: #{tpu_custom_call.1} parent=1 // pred_check
      _
    $region31: #{tpu_custom_call.1} parent=1 // pred_check_branch
      %71 = sbr.rel (0) target = $region33
    $region32: #{tpu_custom_call.1} parent=1 // pred_region
      %72 = dma.done [#allocation6], 128
    $region33: #{tpu_custom_call.1} parent=1 // pred_fallthru
      _
    // Predicated region
    $region34: #{tpu_custom_call.1} parent=1 // pred_check
      _
    $region35: #{tpu_custom_call.1} parent=1 // pred_check_branch
      %74 = sbr.rel (0) target = $region37
    $region36: #{tpu_custom_call.1} parent=1 // pred_region
      %75 = dma.done [#allocation9], 512
    $region37: #{tpu_custom_call.1} parent=1 // pred_fallthru
      _
    // Predicated region
    $region38: #{tpu_custom_call.1} parent=1 // pred_check
      _
    $region39: #{tpu_custom_call.1} parent=1 // pred_check_branch
      %77 = sbr.rel (0) target = $region41
    $region40: #{tpu_custom_call.1} parent=1 // pred_region
      %78 = dma.done [#allocation9], 1024
    $region41: #{tpu_custom_call.1} parent=1 // pred_fallthru
      _
    // Predicated region
    $region42: #{tpu_custom_call.1} parent=1 // pred_check
      _
    $region43: #{tpu_custom_call.1} parent=1 // pred_check_branch
      %80 = sbr.rel (0) target = $region45
    $region44: #{tpu_custom_call.1} parent=1 // pred_region
      %81 = dma.done [#allocation12], 256
    $region45: #{tpu_custom_call.1} parent=1 // pred_fallthru
      _
    %v83 = vld [vmem:[#allocation5] sm:$0xf]
    %v84 = vld [vmem:[#allocation5 + $0x4] sm:$0xf]
    %v85 = vld [vmem:[#allocation8] sm:$0xff]
    %v86 = vld [vmem:[#allocation8 + $0x8] sm:$0xff]
    %v87 = vld [vmem:[#allocation8 + $0x10] sm:$0xff]
    %v88 = vld [vmem:[#allocation8 + $0x18] sm:$0xff]
    %v89 = vld [vmem:[%s3] sm:$0x3]
    %v91 = vlaneseq
    %v92 = vshrl.u32 %v91, 7
    %v93 = vsub.s32 0, %v92
    %v94 = vrot.slane %v89, %v93
    %v95 = vlaneseq
    %v96 = vshrl.u32 %v95, 7
    %v97 = vsub.s32 1, %v96
    %v98 = vrot.slane %v89, %v97
    %v103 = vunpack.c.l.b16 %v83
    %v104 = vunpack.c.l.b16 %v84
    %v105 = vpack.c.b16 %v104, %v103
    %v110 = vunpack.c.l.b16 %v85
    %v111 = vunpack.c.h.b16 %v85
    %v112 = vunpack.c.l.b16 %v86
    %v113 = vunpack.c.h.b16 %v86
    %v114 = vunpack.c.l.b16 %v87
    %v115 = vunpack.c.h.b16 %v87
    %v116 = vunpack.c.l.b16 %v88
    %v117 = vunpack.c.h.b16 %v88
    %v118 = vpack.c.b16 %v112, %v110
    %v119 = vpack.c.b16 %v113, %v111
    %v120 = vpack.c.b16 %v116, %v114
    %v121 = vpack.c.b16 %v117, %v115
    %vm126 = vcmask 261120
    %v128 = vsel %vm126, %v105, 0
    %130 = vmatprep.subr.bf16.mxu0 %v119
    %131 = vmatpush1.bf16.msra.mxu0 %v118
    %132 = vmatprep.subr.bf16.mxu0 %v121
    %133 = vmatpush1.bf16.msra.mxu0 %v120
    %134 = vmatprep.subr.bf16.mxu0 0
    %135 = vmatpush1.bf16.msra.mxu0 0
    %136 = vmatprep.subr.bf16.mxu0 0
    %137 = vmatpush1.bf16.msra.mxu0 0
    %138 = vmatprep.subr.bf16.mxu0 0
    %139 = vmatpush1.bf16.msra.mxu0 0
    %140 = vmatprep.subr.bf16.mxu0 0
    %141 = vmatpush1.bf16.msra.mxu0 0
    %142 = vmatprep.subr.bf16.mxu0 0
    %143 = vmatpush1.bf16.msra.mxu0 0
    %144 = vmatprep.subr.bf16.mxu0 0
    %145 = vmatpush1.bf16.msra.mxu0 0
    %146 = vmatprep.subr.bf16.mxu0 0
    %147 = vmatpush1.bf16.msra.mxu0 0
    %148 = vmatprep.subr.bf16.mxu0 0
    %149 = vmatpush1.bf16.msra.mxu0 0
    %150 = vmatprep.subr.bf16.mxu0 0
    %151 = vmatpush1.bf16.msra.mxu0 0
    %152 = vmatprep.subr.bf16.mxu0 0
    %153 = vmatpush1.bf16.msra.mxu0 0
    %154 = vmatprep.subr.bf16.mxu0 0
    %155 = vmatpush1.bf16.msra.mxu0 0
    %156 = vmatprep.subr.bf16.mxu0 0
    %157 = vmatpush1.bf16.msra.mxu0 0
    %158 = vmatprep.subr.bf16.mxu0 0
    %159 = vmatpush1.bf16.msra.mxu0 0
    %160 = vmatprep.subr.bf16.mxu0 0
    %161 = vmatpush1.bf16.msra.mxu0 0
    %162 = vmatprep.mubr.bf16.mxu0 0
    %163 = vmatmul.mubr.bf16.gmra.mrb[0].mxu0 %v128
    %v164 = vpop.f32.mrb[0].mxu0
    %v165 = vadd.f32 %v94, %v164
    %v166 = vpop.f32.mrb[0].mxu0
    %v167 = vadd.f32 %v98, %v166
    %v168 = vpop.f32.mrb[0].mxu0
    %v169 = vadd.f32 %v94, %v168
    %v170 = vpop.f32.mrb[0].mxu0
    %v171 = vadd.f32 %v98, %v170
    %172 = vdwg.mxu0
    %173 = vst [vmem:[#allocation2] sm:$0xff] %v165
    %174 = vst [vmem:[#allocation2 + $0x8] sm:$0xff] %v167
    %175 = vst [vmem:[#allocation2 + $0x10] sm:$0xff] %v169
    %176 = vst [vmem:[#allocation2 + $0x18] sm:$0xff] %v171
    %v177 = vld [vmem:[#allocation10] sm:$0xff]
    %v178 = vld [vmem:[#allocation10 + $0x8] sm:$0xff]
    %v179 = vld [vmem:[#allocation10 + $0x10] sm:$0xff]
    %v180 = vld [vmem:[#allocation10 + $0x18] sm:$0xff]
    %v181 = vld [vmem:[#allocation10 + $0x20] sm:$0xff]
    %v182 = vld [vmem:[#allocation10 + $0x28] sm:$0xff]
    %v183 = vld [vmem:[#allocation10 + $0x30] sm:$0xff]
    %v184 = vld [vmem:[#allocation10 + $0x38] sm:$0xff]
    %v185 = vld [vmem:[#allocation2] sm:$0x3]
    %v186 = vld [vmem:[#allocation2 + $0x8] sm:$0x3]
    %v195 = vunpack.c.l.b16 %v177
    %v196 = vunpack.c.h.b16 %v177
    %v197 = vunpack.c.l.b16 %v178
    %v198 = vunpack.c.h.b16 %v178
    %v199 = vunpack.c.l.b16 %v179
    %v200 = vunpack.c.h.b16 %v179
    %v201 = vunpack.c.l.b16 %v180
    %v202 = vunpack.c.h.b16 %v180
    %v203 = vunpack.c.l.b16 %v181
    %v204 = vunpack.c.h.b16 %v181
    %v205 = vunpack.c.l.b16 %v182
    %v206 = vunpack.c.h.b16 %v182
    %v207 = vunpack.c.l.b16 %v183
    %v208 = vunpack.c.h.b16 %v183
    %v209 = vunpack.c.l.b16 %v184
    %v210 = vunpack.c.h.b16 %v184
    %v211 = vpack.c.b16 %v197, %v195
    %v212 = vpack.c.b16 %v198, %v196
    %v213 = vpack.c.b16 %v201, %v199
    %v214 = vpack.c.b16 %v202, %v200
    %v215 = vpack.c.b16 %v205, %v203
    %v216 = vpack.c.b16 %v206, %v204
    %v217 = vpack.c.b16 %v209, %v207
    %v218 = vpack.c.b16 %v210, %v208
    %vm227 = vcmask 523264
    %v229 = vsel %vm227, 0, 0
    %231 = vmatprep.subr.bf16.mxu0 %v212
    %232 = vmatpush1.bf16.msra.mxu0 %v211
    %233 = vmatprep.subr.bf16.mxu0 %v214
    %234 = vmatpush1.bf16.msra.mxu0 %v213
    %235 = vmatprep.subr.bf16.mxu0 %v216
    %236 = vmatpush1.bf16.msra.mxu0 %v215
    %237 = vmatprep.subr.bf16.mxu0 %v218
    %238 = vmatpush1.bf16.msra.mxu0 %v217
    %239 = vmatprep.subr.bf16.mxu0 0
    %240 = vmatpush1.bf16.msra.mxu0 0
    %241 = vmatprep.subr.bf16.mxu0 0
    %242 = vmatpush1.bf16.msra.mxu0 0
    %243 = vmatprep.subr.bf16.mxu0 0
    %244 = vmatpush1.bf16.msra.mxu0 0
    %245 = vmatprep.subr.bf16.mxu0 0
    %246 = vmatpush1.bf16.msra.mxu0 0
    %247 = vmatprep.subr.bf16.mxu0 0
    %248 = vmatpush1.bf16.msra.mxu0 0
    %249 = vmatprep.subr.bf16.mxu0 0
    %250 = vmatpush1.bf16.msra.mxu0 0
    %251 = vmatprep.subr.bf16.mxu0 0
    %252 = vmatpush1.bf16.msra.mxu0 0
    %253 = vmatprep.subr.bf16.mxu0 0
    %254 = vmatpush1.bf16.msra.mxu0 0
    %255 = vmatprep.subr.bf16.mxu0 0
    %256 = vmatpush1.bf16.msra.mxu0 0
    %257 = vmatprep.subr.bf16.mxu0 0
    %258 = vmatpush1.bf16.msra.mxu0 0
    %259 = vmatprep.subr.bf16.mxu0 0
    %260 = vmatpush1.bf16.msra.mxu0 0
    %261 = vmatprep.subr.bf16.mxu0 0
    %262 = vmatpush1.bf16.msra.mxu0 0
    %263 = vmatprep.mubr.bf16.mxu0 0
    %264 = vmatmul.mubr.bf16.gmra.mrb[0].mxu0 %v229
    %v265 = vpop.f32.mrb[0].mxu0
    %v266 = vadd.f32 0.0, %v265
    %v267 = vpop.f32.mrb[0].mxu0
    %v268 = vadd.f32 0.0, %v267
    %v269 = vpop.f32.mrb[0].mxu0
    %v270 = vpop.f32.mrb[0].mxu0
    %271 = vdwg.mxu0
    %v272 = vadd.f32 %v185, %v266
    %v273 = vadd.f32 %v186, %v268
    %v274 = vxor.u32 %v272, 2147483648
    %v275 = vxor.u32 %v273, 2147483648
    %v276 = vmul.f32 %v274, 1.442695
    %v277 = vpow.pop %v276
    %v278 = vmul.f32 %v275, 1.442695
    %v279 = vpow.pop %v278
    %v280 = vadd.f32 %v277, 1.0
    %v281 = vadd.f32 %v279, 1.0
    %v282 = vrcp.pop %v280
    %v283 = vmul.f32 1.0, %v282
    %v284 = vrcp.pop %v281
    %v285 = vmul.f32 1.0, %v284
    %v286 = vtanh.pop %v273
    %v287 = vmul.f32 %v283, 0.0
    %v288 = vmul.f32 %v283, %v286
    %290 = vrot.lane.b32.xlu0 %v288, 64
    %v291 = vpop.permute.xlu0 %290
    %v293 = vadd.f32 %v287, %v291
    %v294 = vtanh.pop %v293
    %v295 = vmul.f32 %v285, %v294
    %297 = vrot.lane.b32.xlu0 %v295, 64
    %v298 = vpop.permute.xlu0 %297
    %vm300 = vcmask 254976
    %301 = vst.msk [vmem:[#allocation3] sm:$0x3] %vm300, %v298
    %302 = vrot.lane.b32.xlu0 %v295, 32
    %v303 = vpop.permute.xlu0 %302
    %305 = vst.msk [vmem:[#allocation4 + $0xe] sm:$0x3] %vm300, %v303
    %v306 = vld [vmem:[#allocation2] sm:$0xc]
    %v307 = vld [vmem:[#allocation2 + $0x8] sm:$0xc]
    %v308 = vpack.c.bf16 %v295, %v295
    %310 = vrot.lane.b32.xlu0 %v308, 64
    %v311 = vpop.permute.xlu0 %310
    %v313 = vsel %vm227, %v311, 0
    %315 = vmatprep.subr.bf16.mxu0 %v212
    %316 = vmatpush1.bf16.msra.mxu0 %v211
    %317 = vmatprep.subr.bf16.mxu0 %v214
    %318 = vmatpush1.bf16.msra.mxu0 %v213
    %319 = vmatprep.subr.bf16.mxu0 %v216
    %320 = vmatpush1.bf16.msra.mxu0 %v215
    %321 = vmatprep.subr.bf16.mxu0 %v218
    %322 = vmatpush1.bf16.msra.mxu0 %v217
    %323 = vmatprep.subr.bf16.mxu0 0
    %324 = vmatpush1.bf16.msra.mxu0 0
    %325 = vmatprep.subr.bf16.mxu0 0
    %326 = vmatpush1.bf16.msra.mxu0 0
    %327 = vmatprep.subr.bf16.mxu0 0
    %328 = vmatpush1.bf16.msra.mxu0 0
    %329 = vmatprep.subr.bf16.mxu0 0
    %330 = vmatpush1.bf16.msra.mxu0 0
    %331 = vmatprep.subr.bf16.mxu0 0
    %332 = vmatpush1.bf16.msra.mxu0 0
    %333 = vmatprep.subr.bf16.mxu0 0
    %334 = vmatpush1.bf16.msra.mxu0 0
    %335 = vmatprep.subr.bf16.mxu0 0
    %336 = vmatpush1.bf16.msra.mxu0 0
    %337 = vmatprep.subr.bf16.mxu0 0
    %338 = vmatpush1.bf16.msra.mxu0 0
    %339 = vmatprep.subr.bf16.mxu0 0
    %340 = vmatpush1.bf16.msra.mxu0 0
    %341 = vmatprep.subr.bf16.mxu0 0
    %342 = vmatpush1.bf16.msra.mxu0 0
    %343 = vmatprep.subr.bf16.mxu0 0
    %344 = vmatpush1.bf16.msra.mxu0 0
    %345 = vmatprep.subr.bf16.mxu0 0
    %346 = vmatpush1.bf16.msra.mxu0 0
    %347 = vmatprep.mubr.bf16.mxu0 0
    %348 = vmatmul.mubr.bf16.gmra.mrb[0].mxu0 %v313
    %v349 = vpop.f32.mrb[0].mxu0
    %v350 = vadd.f32 0.0, %v349
    %v351 = vpop.f32.mrb[0].mxu0
    %v352 = vadd.f32 0.0, %v351
    %v353 = vpop.f32.mrb[0].mxu0
    %v354 = vpop.f32.mrb[0].mxu0
    %355 = vdwg.mxu0
    %v358 = vrot.slane %v350, 6
    %v359 = vrot.slane %v352, 6
    %v362 = vadd.f32 %v306, %v358
    %v363 = vadd.f32 %v307, %v359
    %v364 = vxor.u32 %v362, 2147483648
    %v365 = vxor.u32 %v363, 2147483648
    %v366 = vmul.f32 %v364, 1.442695
    %v367 = vpow.pop %v366
    %v368 = vmul.f32 %v365, 1.442695
    %v369 = vpow.pop %v368
    %v370 = vadd.f32 %v367, 1.0
    %v371 = vadd.f32 %v369, 1.0
    %v372 = vrcp.pop %v370
    %v373 = vmul.f32 1.0, %v372
    %v374 = vrcp.pop %v371
    %v375 = vmul.f32 1.0, %v374
    %v376 = vtanh.pop %v363
    %v378 = vrot.slane %v293, 6
    %v380 = vmul.f32 %v373, %v378
    %v381 = vmul.f32 %v373, %v376
    %383 = vrot.lane.b32.xlu0 %v381, 64
    %v384 = vpop.permute.xlu0 %383
    %v386 = vadd.f32 %v380, %v384
    %v387 = vtanh.pop %v386
    %v388 = vmul.f32 %v375, %v387
    %390 = vrot.lane.b32.xlu0 %v388, 64
    %v391 = vpop.permute.xlu0 %390
    %vm393 = vcmask 257026
    %394 = vst.msk [vmem:[#allocation3] sm:$0xc] %vm393, %v391
    %395 = vrot.lane.b32.xlu0 %v388, 32
    %v396 = vpop.permute.xlu0 %395
    %398 = vst.msk [vmem:[#allocation4 + $0xa] sm:$0xc] %vm393, %v396
    %v399 = vld [vmem:[#allocation2] sm:$0x30]
    %v400 = vld [vmem:[#allocation2 + $0x8] sm:$0x30]
    %v401 = vpack.c.bf16 %v388, %v388
    %v403 = vrot.slane %v401, 1
    %404 = vrot.lane.b32.xlu0 %v403, 64
    %v405 = vpop.permute.xlu0 %404
    %v407 = vsel %vm227, %v405, 0
    %409 = vmatprep.subr.bf16.mxu0 %v212
    %410 = vmatpush1.bf16.msra.mxu0 %v211
    %411 = vmatprep.subr.bf16.mxu0 %v214
    %412 = vmatpush1.bf16.msra.mxu0 %v213
    %413 = vmatprep.subr.bf16.mxu0 %v216
    %414 = vmatpush1.bf16.msra.mxu0 %v215
    %415 = vmatprep.subr.bf16.mxu0 %v218
    %416 = vmatpush1.bf16.msra.mxu0 %v217
    %417 = vmatprep.subr.bf16.mxu0 0
    %418 = vmatpush1.bf16.msra.mxu0 0
    %419 = vmatprep.subr.bf16.mxu0 0
    %420 = vmatpush1.bf16.msra.mxu0 0
    %421 = vmatprep.subr.bf16.mxu0 0
    %422 = vmatpush1.bf16.msra.mxu0 0
    %423 = vmatprep.subr.bf16.mxu0 0
    %424 = vmatpush1.bf16.msra.mxu0 0
    %425 = vmatprep.subr.bf16.mxu0 0
    %426 = vmatpush1.bf16.msra.mxu0 0
    %427 = vmatprep.subr.bf16.mxu0 0
    %428 = vmatpush1.bf16.msra.mxu0 0
    %429 = vmatprep.subr.bf16.mxu0 0
    %430 = vmatpush1.bf16.msra.mxu0 0
    %431 = vmatprep.subr.bf16.mxu0 0
    %432 = vmatpush1.bf16.msra.mxu0 0
    %433 = vmatprep.subr.bf16.mxu0 0
    %434 = vmatpush1.bf16.msra.mxu0 0
    %435 = vmatprep.subr.bf16.mxu0 0
    %436 = vmatpush1.bf16.msra.mxu0 0
    %437 = vmatprep.subr.bf16.mxu0 0
    %438 = vmatpush1.bf16.msra.mxu0 0
    %439 = vmatprep.subr.bf16.mxu0 0
    %440 = vmatpush1.bf16.msra.mxu0 0
    %441 = vmatprep.mubr.bf16.mxu0 0
    %442 = vmatmul.mubr.bf16.gmra.mrb[0].mxu0 %v407
    %v443 = vpop.f32.mrb[0].mxu0
    %v444 = vadd.f32 0.0, %v443
    %v445 = vpop.f32.mrb[0].mxu0
    %v446 = vadd.f32 0.0, %v445
    %v447 = vpop.f32.mrb[0].mxu0
    %v448 = vpop.f32.mrb[0].mxu0
    %449 = vdwg.mxu0
    %v452 = vrot.slane %v444, 4
    %v453 = vrot.slane %v446, 4
    %v456 = vadd.f32 %v399, %v452
    %v457 = vadd.f32 %v400, %v453
    %v458 = vxor.u32 %v456, 2147483648
    %v459 = vxor.u32 %v457, 2147483648
    %v460 = vmul.f32 %v458, 1.442695
    %v461 = vpow.pop %v460
    %v462 = vmul.f32 %v459, 1.442695
    %v463 = vpow.pop %v462
    %v464 = vadd.f32 %v461, 1.0
    %v465 = vadd.f32 %v463, 1.0
    %v466 = vrcp.pop %v464
    %v467 = vmul.f32 1.0, %v466
    %v468 = vrcp.pop %v465
    %v469 = vmul.f32 1.0, %v468
    %v470 = vtanh.pop %v457
    %v472 = vrot.slane %v386, 6
    %v474 = vmul.f32 %v467, %v472
    %v475 = vmul.f32 %v467, %v470
    %477 = vrot.lane.b32.xlu0 %v475, 64
    %v478 = vpop.permute.xlu0 %477
    %v480 = vadd.f32 %v474, %v478
    %v481 = vtanh.pop %v480
    %v482 = vmul.f32 %v469, %v481
    %484 = vrot.lane.b32.xlu0 %v482, 64
    %v485 = vpop.permute.xlu0 %484
    %vm487 = vcmask 259076
    %488 = vst.msk [vmem:[#allocation3] sm:$0x30] %vm487, %v485
    %489 = vrot.lane.b32.xlu0 %v482, 32
    %v490 = vpop.permute.xlu0 %489
    %492 = vst.msk [vmem:[#allocation4 + $0x6] sm:$0x30] %vm487, %v490
    %v493 = vld [vmem:[#allocation2] sm:$0xc0]
    %v494 = vld [vmem:[#allocation2 + $0x8] sm:$0xc0]
    %v495 = vpack.c.bf16 %v482, %v482
    %v497 = vrot.slane %v495, 2
    %498 = vrot.lane.b32.xlu0 %v497, 64
    %v499 = vpop.permute.xlu0 %498
    %v501 = vsel %vm227, %v499, 0
    %503 = vmatprep.subr.bf16.mxu0 %v212
    %504 = vmatpush1.bf16.msra.mxu0 %v211
    %505 = vmatprep.subr.bf16.mxu0 %v214
    %506 = vmatpush1.bf16.msra.mxu0 %v213
    %507 = vmatprep.subr.bf16.mxu0 %v216
    %508 = vmatpush1.bf16.msra.mxu0 %v215
    %509 = vmatprep.subr.bf16.mxu0 %v218
    %510 = vmatpush1.bf16.msra.mxu0 %v217
    %511 = vmatprep.subr.bf16.mxu0 0
    %512 = vmatpush1.bf16.msra.mxu0 0
    %513 = vmatprep.subr.bf16.mxu0 0
    %514 = vmatpush1.bf16.msra.mxu0 0
    %515 = vmatprep.subr.bf16.mxu0 0
    %516 = vmatpush1.bf16.msra.mxu0 0
    %517 = vmatprep.subr.bf16.mxu0 0
    %518 = vmatpush1.bf16.msra.mxu0 0
    %519 = vmatprep.subr.bf16.mxu0 0
    %520 = vmatpush1.bf16.msra.mxu0 0
    %521 = vmatprep.subr.bf16.mxu0 0
    %522 = vmatpush1.bf16.msra.mxu0 0
    %523 = vmatprep.subr.bf16.mxu0 0
    %524 = vmatpush1.bf16.msra.mxu0 0
    %525 = vmatprep.subr.bf16.mxu0 0
    %526 = vmatpush1.bf16.msra.mxu0 0
    %527 = vmatprep.subr.bf16.mxu0 0
    %528 = vmatpush1.bf16.msra.mxu0 0
    %529 = vmatprep.subr.bf16.mxu0 0
    %530 = vmatpush1.bf16.msra.mxu0 0
    %531 = vmatprep.subr.bf16.mxu0 0
    %532 = vmatpush1.bf16.msra.mxu0 0
    %533 = vmatprep.subr.bf16.mxu0 0
    %534 = vmatpush1.bf16.msra.mxu0 0
    %535 = vmatprep.mubr.bf16.mxu0 0
    %536 = vmatmul.mubr.bf16.gmra.mrb[0].mxu0 %v501
    %v537 = vpop.f32.mrb[0].mxu0
    %v538 = vadd.f32 0.0, %v537
    %v539 = vpop.f32.mrb[0].mxu0
    %v540 = vadd.f32 0.0, %v539
    %v541 = vpop.f32.mrb[0].mxu0
    %v542 = vpop.f32.mrb[0].mxu0
    %543 = vdwg.mxu0
    %v546 = vrot.slane %v538, 2
    %v547 = vrot.slane %v540, 2
    %v550 = vadd.f32 %v493, %v546
    %v551 = vadd.f32 %v494, %v547
    %v552 = vxor.u32 %v550, 2147483648
    %v553 = vxor.u32 %v551, 2147483648
    %v554 = vmul.f32 %v552, 1.442695
    %v555 = vpow.pop %v554
    %v556 = vmul.f32 %v553, 1.442695
    %v557 = vpow.pop %v556
    %v558 = vadd.f32 %v555, 1.0
    %v559 = vadd.f32 %v557, 1.0
    %v560 = vrcp.pop %v558
    %v561 = vmul.f32 1.0, %v560
    %v562 = vrcp.pop %v559
    %v563 = vmul.f32 1.0, %v562
    %v564 = vtanh.pop %v551
    %v566 = vrot.slane %v480, 6
    %v568 = vmul.f32 %v561, %v566
    %v569 = vmul.f32 %v561, %v564
    %571 = vrot.lane.b32.xlu0 %v569, 64
    %v572 = vpop.permute.xlu0 %571
    %v574 = vadd.f32 %v568, %v572
    %v575 = vtanh.pop %v574
    %v576 = vmul.f32 %v563, %v575
    %578 = vrot.lane.b32.xlu0 %v576, 64
    %v579 = vpop.permute.xlu0 %578
    %vm581 = vcmask 261126
    %582 = vst.msk [vmem:[#allocation3] sm:$0xc0] %vm581, %v579
    %583 = vrot.lane.b32.xlu0 %v576, 32
    %v584 = vpop.permute.xlu0 %583
    %586 = vst.msk [vmem:[#allocation4 + $0x2] sm:$0xc0] %vm581, %v584
    %v587 = vld [vmem:[#allocation2 + $0x10] sm:$0x3]
    %v588 = vld [vmem:[#allocation2 + $0x18] sm:$0x3]
    %v589 = vpack.c.bf16 %v576, %v576
    %v591 = vrot.slane %v589, 3
    %592 = vrot.lane.b32.xlu0 %v591, 64
    %v593 = vpop.permute.xlu0 %592
    %v595 = vsel %vm227, %v593, 0
    %597 = vmatprep.subr.bf16.mxu0 %v212
    %598 = vmatpush1.bf16.msra.mxu0 %v211
    %599 = vmatprep.subr.bf16.mxu0 %v214
    %600 = vmatpush1.bf16.msra.mxu0 %v213
    %601 = vmatprep.subr.bf16.mxu0 %v216
    %602 = vmatpush1.bf16.msra.mxu0 %v215
    %603 = vmatprep.subr.bf16.mxu0 %v218
    %604 = vmatpush1.bf16.msra.mxu0 %v217
    %605 = vmatprep.subr.bf16.mxu0 0
    %606 = vmatpush1.bf16.msra.mxu0 0
    %607 = vmatprep.subr.bf16.mxu0 0
    %608 = vmatpush1.bf16.msra.mxu0 0
    %609 = vmatprep.subr.bf16.mxu0 0
    %610 = vmatpush1.bf16.msra.mxu0 0
    %611 = vmatprep.subr.bf16.mxu0 0
    %612 = vmatpush1.bf16.msra.mxu0 0
    %613 = vmatprep.subr.bf16.mxu0 0
    %614 = vmatpush1.bf16.msra.mxu0 0
    %615 = vmatprep.subr.bf16.mxu0 0
    %616 = vmatpush1.bf16.msra.mxu0 0
    %617 = vmatprep.subr.bf16.mxu0 0
    %618 = vmatpush1.bf16.msra.mxu0 0
    %619 = vmatprep.subr.bf16.mxu0 0
    %620 = vmatpush1.bf16.msra.mxu0 0
    %621 = vmatprep.subr.bf16.mxu0 0
    %622 = vmatpush1.bf16.msra.mxu0 0
    %623 = vmatprep.subr.bf16.mxu0 0
    %624 = vmatpush1.bf16.msra.mxu0 0
    %625 = vmatprep.subr.bf16.mxu0 0
    %626 = vmatpush1.bf16.msra.mxu0 0
    %627 = vmatprep.subr.bf16.mxu0 0
    %628 = vmatpush1.bf16.msra.mxu0 0
    %629 = vmatprep.mubr.bf16.mxu0 0
    %630 = vmatmul.mubr.bf16.gmra.mrb[0].mxu0 %v595
    %v631 = vpop.f32.mrb[0].mxu0
    %v632 = vadd.f32 0.0, %v631
    %v633 = vpop.f32.mrb[0].mxu0
    %v634 = vadd.f32 0.0, %v633
    %v635 = vpop.f32.mrb[0].mxu0
    %v636 = vpop.f32.mrb[0].mxu0
    %637 = vdwg.mxu0
    %v638 = vadd.f32 %v587, %v632
    %v639 = vadd.f32 %v588, %v634
    %v640 = vxor.u32 %v638, 2147483648
    %v641 = vxor.u32 %v639, 2147483648
    %v642 = vmul.f32 %v640, 1.442695
    %v643 = vpow.pop %v642
    %v644 = vmul.f32 %v641, 1.442695
    %v645 = vpow.pop %v644
    %v646 = vadd.f32 %v643, 1.0
    %v647 = vadd.f32 %v645, 1.0
    %v648 = vrcp.pop %v646
    %v649 = vmul.f32 1.0, %v648
    %v650 = vrcp.pop %v647
    %v651 = vmul.f32 1.0, %v650
    %v652 = vtanh.pop %v639
    %v654 = vrot.slane %v574, 6
    %v656 = vmul.f32 %v649, %v654
    %v657 = vmul.f32 %v649, %v652
    %659 = vrot.lane.b32.xlu0 %v657, 64
    %v660 = vpop.permute.xlu0 %659
    %v662 = vadd.f32 %v656, %v660
    %v663 = vtanh.pop %v662
    %v664 = vmul.f32 %v651, %v663
    %666 = vrot.lane.b32.xlu0 %v664, 64
    %v667 = vpop.permute.xlu0 %666
    %669 = vst.msk [vmem:[#allocation3 + $0x8] sm:$0x3] %vm300, %v667
    %670 = vrot.lane.b32.xlu0 %v664, 32
    %v671 = vpop.permute.xlu0 %670
    %673 = vst.msk [vmem:[#allocation4 + $0x6] sm:$0x3] %vm300, %v671
    %v674 = vld [vmem:[#allocation2 + $0x10] sm:$0xc]
    %v675 = vld [vmem:[#allocation2 + $0x18] sm:$0xc]
    %v676 = vpack.c.bf16 %v664, %v664
    %678 = vrot.lane.b32.xlu0 %v676, 64
    %v679 = vpop.permute.xlu0 %678
    %v681 = vsel %vm227, %v679, 0
    %683 = vmatprep.subr.bf16.mxu0 %v212
    %684 = vmatpush1.bf16.msra.mxu0 %v211
    %685 = vmatprep.subr.bf16.mxu0 %v214
    %686 = vmatpush1.bf16.msra.mxu0 %v213
    %687 = vmatprep.subr.bf16.mxu0 %v216
    %688 = vmatpush1.bf16.msra.mxu0 %v215
    %689 = vmatprep.subr.bf16.mxu0 %v218
    %690 = vmatpush1.bf16.msra.mxu0 %v217
    %691 = vmatprep.subr.bf16.mxu0 0
    %692 = vmatpush1.bf16.msra.mxu0 0
    %693 = vmatprep.subr.bf16.mxu0 0
    %694 = vmatpush1.bf16.msra.mxu0 0
    %695 = vmatprep.subr.bf16.mxu0 0
    %696 = vmatpush1.bf16.msra.mxu0 0
    %697 = vmatprep.subr.bf16.mxu0 0
    %698 = vmatpush1.bf16.msra.mxu0 0
    %699 = vmatprep.subr.bf16.mxu0 0
    %700 = vmatpush1.bf16.msra.mxu0 0
    %701 = vmatprep.subr.bf16.mxu0 0
    %702 = vmatpush1.bf16.msra.mxu0 0
    %703 = vmatprep.subr.bf16.mxu0 0
    %704 = vmatpush1.bf16.msra.mxu0 0
    %705 = vmatprep.subr.bf16.mxu0 0
    %706 = vmatpush1.bf16.msra.mxu0 0
    %707 = vmatprep.subr.bf16.mxu0 0
    %708 = vmatpush1.bf16.msra.mxu0 0
    %709 = vmatprep.subr.bf16.mxu0 0
    %710 = vmatpush1.bf16.msra.mxu0 0
    %711 = vmatprep.subr.bf16.mxu0 0
    %712 = vmatpush1.bf16.msra.mxu0 0
    %713 = vmatprep.subr.bf16.mxu0 0
    %714 = vmatpush1.bf16.msra.mxu0 0
    %715 = vmatprep.mubr.bf16.mxu0 0
    %716 = vmatmul.mubr.bf16.gmra.mrb[0].mxu0 %v681
    %v717 = vpop.f32.mrb[0].mxu0
    %v718 = vadd.f32 0.0, %v717
    %v719 = vpop.f32.mrb[0].mxu0
    %v720 = vadd.f32 0.0, %v719
    %v721 = vpop.f32.mrb[0].mxu0
    %v722 = vpop.f32.mrb[0].mxu0
    %723 = vdwg.mxu0
    %v726 = vrot.slane %v718, 6
    %v727 = vrot.slane %v720, 6
    %v730 = vadd.f32 %v674, %v726
    %v731 = vadd.f32 %v675, %v727
    %v732 = vxor.u32 %v730, 2147483648
    %v733 = vxor.u32 %v731, 2147483648
    %v734 = vmul.f32 %v732, 1.442695
    %v735 = vpow.pop %v734
    %v736 = vmul.f32 %v733, 1.442695
    %v737 = vpow.pop %v736
    %v738 = vadd.f32 %v735, 1.0
    %v739 = vadd.f32 %v737, 1.0
    %v740 = vrcp.pop %v738
    %v741 = vmul.f32 1.0, %v740
    %v742 = vrcp.pop %v739
    %v743 = vmul.f32 1.0, %v742
    %v744 = vtanh.pop %v731
    %v746 = vrot.slane %v662, 6
    %v748 = vmul.f32 %v741, %v746
    %v749 = vmul.f32 %v741, %v744
    %751 = vrot.lane.b32.xlu0 %v749, 64
    %v752 = vpop.permute.xlu0 %751
    %v754 = vadd.f32 %v748, %v752
    %v755 = vtanh.pop %v754
    %v756 = vmul.f32 %v743, %v755
    %758 = vrot.lane.b32.xlu0 %v756, 64
    %v759 = vpop.permute.xlu0 %758
    %761 = vst.msk [vmem:[#allocation3 + $0x8] sm:$0xc] %vm393, %v759
    %762 = vrot.lane.b32.xlu0 %v756, 32
    %v763 = vpop.permute.xlu0 %762
    %765 = vst.msk [vmem:[#allocation4 + $0x2] sm:$0xc] %vm393, %v763
    %v766 = vld [vmem:[#allocation2 + $0x10] sm:$0x30]
    %v767 = vld [vmem:[#allocation2 + $0x18] sm:$0x30]
    %v768 = vpack.c.bf16 %v756, %v756
    %v770 = vrot.slane %v768, 1
    %771 = vrot.lane.b32.xlu0 %v770, 64
    %v772 = vpop.permute.xlu0 %771
    %v774 = vsel %vm227, %v772, 0
    %776 = vmatprep.subr.bf16.mxu0 %v212
    %777 = vmatpush1.bf16.msra.mxu0 %v211
    %778 = vmatprep.subr.bf16.mxu0 %v214
    %779 = vmatpush1.bf16.msra.mxu0 %v213
    %780 = vmatprep.subr.bf16.mxu0 %v216
    %781 = vmatpush1.bf16.msra.mxu0 %v215
    %782 = vmatprep.subr.bf16.mxu0 %v218
    %783 = vmatpush1.bf16.msra.mxu0 %v217
    %784 = vmatprep.subr.bf16.mxu0 0
    %785 = vmatpush1.bf16.msra.mxu0 0
    %786 = vmatprep.subr.bf16.mxu0 0
    %787 = vmatpush1.bf16.msra.mxu0 0
    %788 = vmatprep.subr.bf16.mxu0 0
    %789 = vmatpush1.bf16.msra.mxu0 0
    %790 = vmatprep.subr.bf16.mxu0 0
    %791 = vmatpush1.bf16.msra.mxu0 0
    %792 = vmatprep.subr.bf16.mxu0 0
    %793 = vmatpush1.bf16.msra.mxu0 0
    %794 = vmatprep.subr.bf16.mxu0 0
    %795 = vmatpush1.bf16.msra.mxu0 0
    %796 = vmatprep.subr.bf16.mxu0 0
    %797 = vmatpush1.bf16.msra.mxu0 0
    %798 = vmatprep.subr.bf16.mxu0 0
    %799 = vmatpush1.bf16.msra.mxu0 0
    %800 = vmatprep.subr.bf16.mxu0 0
    %801 = vmatpush1.bf16.msra.mxu0 0
    %802 = vmatprep.subr.bf16.mxu0 0
    %803 = vmatpush1.bf16.msra.mxu0 0
    %804 = vmatprep.subr.bf16.mxu0 0
    %805 = vmatpush1.bf16.msra.mxu0 0
    %806 = vmatprep.subr.bf16.mxu0 0
    %807 = vmatpush1.bf16.msra.mxu0 0
    %808 = vmatprep.mubr.bf16.mxu0 0
    %809 = vmatmul.mubr.bf16.gmra.mrb[0].mxu0 %v774
    %v810 = vpop.f32.mrb[0].mxu0
    %v811 = vadd.f32 0.0, %v810
    %v812 = vpop.f32.mrb[0].mxu0
    %v813 = vadd.f32 0.0, %v812
    %v814 = vpop.f32.mrb[0].mxu0
    %v815 = vpop.f32.mrb[0].mxu0
    %816 = vdwg.mxu0
    %v819 = vrot.slane %v811, 4
    %v820 = vrot.slane %v813, 4
    %v823 = vadd.f32 %v766, %v819
    %v824 = vadd.f32 %v767, %v820
    %v825 = vxor.u32 %v823, 2147483648
    %v826 = vxor.u32 %v824, 2147483648
    %v827 = vmul.f32 %v825, 1.442695
    %v828 = vpow.pop %v827
    %v829 = vmul.f32 %v826, 1.442695
    %v830 = vpow.pop %v829
    %v831 = vadd.f32 %v828, 1.0
    %v832 = vadd.f32 %v830, 1.0
    %v833 = vrcp.pop %v831
    %v834 = vmul.f32 1.0, %v833
    %v835 = vrcp.pop %v832
    %v836 = vmul.f32 1.0, %v835
    %v837 = vtanh.pop %v824
    %v839 = vrot.slane %v754, 6
    %v841 = vmul.f32 %v834, %v839
    %v842 = vmul.f32 %v834, %v837
    %844 = vrot.lane.b32.xlu0 %v842, 64
    %v845 = vpop.permute.xlu0 %844
    %v847 = vadd.f32 %v841, %v845
    %v848 = vtanh.pop %v847
    %v849 = vmul.f32 %v836, %v848
    %851 = vrot.lane.b32.xlu0 %v849, 64
    %v852 = vpop.permute.xlu0 %851
    %854 = vst.msk [vmem:[#allocation3 + $0x8] sm:$0x30] %vm487, %v852
    %855 = vrot.lane.b32.xlu0 %v849, 32
    %v856 = vpop.permute.xlu0 %855
    %858 = vst.msk [vmem:[#allocation4 - $0x2] sm:$0x30] %vm487, %v856
    %v859 = vld [vmem:[#allocation2 + $0x10] sm:$0xc0]
    %v860 = vld [vmem:[#allocation2 + $0x18] sm:$0xc0]
    %v861 = vpack.c.bf16 %v849, %v849
    %v863 = vrot.slane %v861, 2
    %864 = vrot.lane.b32.xlu0 %v863, 64
    %v865 = vpop.permute.xlu0 %864
    %v867 = vsel %vm227, %v865, 0
    %869 = vmatprep.subr.bf16.mxu0 %v212
    %870 = vmatpush1.bf16.msra.mxu0 %v211
    %871 = vmatprep.subr.bf16.mxu0 %v214
    %872 = vmatpush1.bf16.msra.mxu0 %v213
    %873 = vmatprep.subr.bf16.mxu0 %v216
    %874 = vmatpush1.bf16.msra.mxu0 %v215
    %875 = vmatprep.subr.bf16.mxu0 %v218
    %876 = vmatpush1.bf16.msra.mxu0 %v217
    %877 = vmatprep.subr.bf16.mxu0 0
    %878 = vmatpush1.bf16.msra.mxu0 0
    %879 = vmatprep.subr.bf16.mxu0 0
    %880 = vmatpush1.bf16.msra.mxu0 0
    %881 = vmatprep.subr.bf16.mxu0 0
    %882 = vmatpush1.bf16.msra.mxu0 0
    %883 = vmatprep.subr.bf16.mxu0 0
    %884 = vmatpush1.bf16.msra.mxu0 0
    %885 = vmatprep.subr.bf16.mxu0 0
    %886 = vmatpush1.bf16.msra.mxu0 0
    %887 = vmatprep.subr.bf16.mxu0 0
    %888 = vmatpush1.bf16.msra.mxu0 0
    %889 = vmatprep.subr.bf16.mxu0 0
    %890 = vmatpush1.bf16.msra.mxu0 0
    %891 = vmatprep.subr.bf16.mxu0 0
    %892 = vmatpush1.bf16.msra.mxu0 0
    %893 = vmatprep.subr.bf16.mxu0 0
    %894 = vmatpush1.bf16.msra.mxu0 0
    %895 = vmatprep.subr.bf16.mxu0 0
    %896 = vmatpush1.bf16.msra.mxu0 0
    %897 = vmatprep.subr.bf16.mxu0 0
    %898 = vmatpush1.bf16.msra.mxu0 0
    %899 = vmatprep.subr.bf16.mxu0 0
    %900 = vmatpush1.bf16.msra.mxu0 0
    %901 = vmatprep.mubr.bf16.mxu0 0
    %902 = vmatmul.mubr.bf16.gmra.mrb[0].mxu0 %v867
    %v903 = vpop.f32.mrb[0].mxu0
    %v904 = vadd.f32 0.0, %v903
    %v905 = vpop.f32.mrb[0].mxu0
    %v906 = vadd.f32 0.0, %v905
    %v907 = vpop.f32.mrb[0].mxu0
    %v908 = vpop.f32.mrb[0].mxu0
    %909 = vdwg.mxu0
    %v912 = vrot.slane %v904, 2
    %v913 = vrot.slane %v906, 2
    %v916 = vadd.f32 %v859, %v912
    %v917 = vadd.f32 %v860, %v913
    %v918 = vxor.u32 %v916, 2147483648
    %v919 = vxor.u32 %v917, 2147483648
    %v920 = vmul.f32 %v918, 1.442695
    %v921 = vpow.pop %v920
    %v922 = vmul.f32 %v919, 1.442695
    %v923 = vpow.pop %v922
    %v924 = vadd.f32 %v921, 1.0
    %v925 = vadd.f32 %v923, 1.0
    %v926 = vrcp.pop %v924
    %v927 = vmul.f32 1.0, %v926
    %v928 = vrcp.pop %v925
    %v929 = vmul.f32 1.0, %v928
    %v930 = vtanh.pop %v917
    %v932 = vrot.slane %v847, 6
    %v934 = vmul.f32 %v927, %v932
    %v935 = vmul.f32 %v927, %v930
    %937 = vrot.lane.b32.xlu0 %v935, 64
    %v938 = vpop.permute.xlu0 %937
    %v940 = vadd.f32 %v934, %v938
    %v941 = vtanh.pop %v940
    %v942 = vmul.f32 %v929, %v941
    %944 = vrot.lane.b32.xlu0 %v942, 64
    %v945 = vpop.permute.xlu0 %944
    %947 = vst.msk [vmem:[#allocation3 + $0x8] sm:$0xc0] %vm581, %v945
    %948 = vrot.lane.b32.xlu0 %v942, 32
    %v949 = vpop.permute.xlu0 %948
    %951 = vst.msk [vmem:[#allocation4 - $0x6] sm:$0xc0] %vm581, %v949
    %v952 = vld [vmem:[#allocation3] sm:$0xff]
    %v953 = vld [vmem:[#allocation3 + $0x8] sm:$0xff]
    %v954 = vpack.c.bf16 %v953, %v952
    %v955 = vld [vmem:[#allocation11] sm:$0xf]
    %v956 = vld [vmem:[#allocation11 + $0x4] sm:$0xf]
    %v957 = vld [vmem:[#allocation11 + $0x8] sm:$0xf]
    %v958 = vld [vmem:[#allocation11 + $0xc] sm:$0xf]
    %v959 = vld [vmem:[#allocation4] sm:$0xff]
    %v960 = vld [vmem:[#allocation4 + $0x8] sm:$0xff]
    %v961 = vpack.c.bf16 %v960, %v959
    %v962 = vld [vmem:[%s5] sm:$0xf]
    %v963 = vld [vmem:[%s5 + $0x4] sm:$0xf]
    %v964 = vld [vmem:[%s5 + $0x8] sm:$0xf]
    %v965 = vld [vmem:[%s5 + $0xc] sm:$0xf]
    %v970 = vunpack.c.l.b16 %v962
    %v971 = vunpack.c.l.b16 %v963
    %v972 = vunpack.c.l.b16 %v964
    %v973 = vunpack.c.l.b16 %v965
    %v974 = vpack.c.b16 %v971, %v970
    %v975 = vpack.c.b16 %v973, %v972
    %v979 = vsel %vm126, %v961, 0
    %981 = vmatprep.subr.bf16.mxu0 0
    %982 = vmatpush1.bf16.msra.mxu0 %v974
    %983 = vmatprep.subr.bf16.mxu0 0
    %984 = vmatpush1.bf16.msra.mxu0 %v975
    %985 = vmatprep.subr.bf16.mxu0 0
    %986 = vmatpush1.bf16.msra.mxu0 0
    %987 = vmatprep.subr.bf16.mxu0 0
    %988 = vmatpush1.bf16.msra.mxu0 0
    %989 = vmatprep.subr.bf16.mxu0 0
    %990 = vmatpush1.bf16.msra.mxu0 0
    %991 = vmatprep.subr.bf16.mxu0 0
    %992 = vmatpush1.bf16.msra.mxu0 0
    %993 = vmatprep.subr.bf16.mxu0 0
    %994 = vmatpush1.bf16.msra.mxu0 0
    %995 = vmatprep.subr.bf16.mxu0 0
    %996 = vmatpush1.bf16.msra.mxu0 0
    %997 = vmatprep.subr.bf16.mxu0 0
    %998 = vmatpush1.bf16.msra.mxu0 0
    %999 = vmatprep.subr.bf16.mxu0 0
    %1000 = vmatpush1.bf16.msra.mxu0 0
    %1001 = vmatprep.subr.bf16.mxu0 0
    %1002 = vmatpush1.bf16.msra.mxu0 0
    %1003 = vmatprep.subr.bf16.mxu0 0
    %1004 = vmatpush1.bf16.msra.mxu0 0
    %1005 = vmatprep.subr.bf16.mxu0 0
    %1006 = vmatpush1.bf16.msra.mxu0 0
    %1007 = vmatprep.subr.bf16.mxu0 0
    %1008 = vmatpush1.bf16.msra.mxu0 0
    %1009 = vmatprep.subr.bf16.mxu0 0
    %1010 = vmatpush1.bf16.msra.mxu0 0
    %1011 = vmatprep.subr.bf16.mxu0 0
    %1012 = vmatpush1.bf16.msra.mxu0 0
    %1013 = vmatprep.mubr.bf16.mxu0 0
    %1014 = vmatmul.mubr.bf16.gmra.mrb[0].mxu0 %v979
    %v1015 = vpop.f32.mrb[0].mxu0
    %v1016 = vadd.f32 0.0, %v1015
    %v1017 = vpop.f32.mrb[0].mxu0
    %v1018 = vpop.f32.mrb[0].mxu0
    %v1019 = vadd.f32 0.0, %v1018
    %v1020 = vpop.f32.mrb[0].mxu0
    %1021 = vdwg.mxu0
    %v1026 = vunpack.c.l.b16 %v955
    %v1027 = vunpack.c.l.b16 %v956
    %v1028 = vunpack.c.l.b16 %v957
    %v1029 = vunpack.c.l.b16 %v958
    %v1030 = vpack.c.b16 %v1027, %v1026
    %v1031 = vpack.c.b16 %v1029, %v1028
    %v1035 = vsel %vm126, %v954, 0
    %1037 = vmatprep.subr.bf16.mxu0 0
    %1038 = vmatpush1.bf16.msra.mxu0 %v1030
    %1039 = vmatprep.subr.bf16.mxu0 0
    %1040 = vmatpush1.bf16.msra.mxu0 %v1031
    %1041 = vmatprep.subr.bf16.mxu0 0
    %1042 = vmatpush1.bf16.msra.mxu0 0
    %1043 = vmatprep.subr.bf16.mxu0 0
    %1044 = vmatpush1.bf16.msra.mxu0 0
    %1045 = vmatprep.subr.bf16.mxu0 0
    %1046 = vmatpush1.bf16.msra.mxu0 0
    %1047 = vmatprep.subr.bf16.mxu0 0
    %1048 = vmatpush1.bf16.msra.mxu0 0
    %1049 = vmatprep.subr.bf16.mxu0 0
    %1050 = vmatpush1.bf16.msra.mxu0 0
    %1051 = vmatprep.subr.bf16.mxu0 0
    %1052 = vmatpush1.bf16.msra.mxu0 0
    %1053 = vmatprep.subr.bf16.mxu0 0
    %1054 = vmatpush1.bf16.msra.mxu0 0
    %1055 = vmatprep.subr.bf16.mxu0 0
    %1056 = vmatpush1.bf16.msra.mxu0 0
    %1057 = vmatprep.subr.bf16.mxu0 0
    %1058 = vmatpush1.bf16.msra.mxu0 0
    %1059 = vmatprep.subr.bf16.mxu0 0
    %1060 = vmatpush1.bf16.msra.mxu0 0
    %1061 = vmatprep.subr.bf16.mxu0 0
    %1062 = vmatpush1.bf16.msra.mxu0 0
    %1063 = vmatprep.subr.bf16.mxu0 0
    %1064 = vmatpush1.bf16.msra.mxu0 0
    %1065 = vmatprep.subr.bf16.mxu0 0
    %1066 = vmatpush1.bf16.msra.mxu0 0
    %1067 = vmatprep.subr.bf16.mxu0 0
    %1068 = vmatpush1.bf16.msra.mxu0 0
    %1069 = vmatprep.mubr.bf16.mxu0 0
    %1070 = vmatmul.mubr.bf16.gmra.mrb[0].mxu0 %v1035
    %v1071 = vpop.f32.mrb[0].mxu0
    %v1072 = vadd.f32 %v1016, %v1071
    %v1073 = vpop.f32.mrb[0].mxu0
    %v1074 = vpop.f32.mrb[0].mxu0
    %v1075 = vadd.f32 %v1019, %v1074
    %v1076 = vpop.f32.mrb[0].mxu0
    %1077 = vdwg.mxu0
    %v1078 = vld [vmem:[%s6] sm:$0x1]
    %v1080 = vlaneseq
    %v1081 = vshrl.u32 %v1080, 7
    %v1082 = vsub.s32 0, %v1081
    %v1083 = vrot.slane %v1078, %v1082
    %v1085 = vadd.f32 %v1072, %v1083
    %v1086 = vadd.f32 %v1075, %v1083
    %1087 = vst [vmem:[#allocation13] sm:$0xff] %v1085
    %1088 = vst [vmem:[#allocation13 + $0x8] sm:$0xff] %v1086
    // Predicated region
    $region46: #{tpu_custom_call.1} parent=1 // pred_check
      _
    $region47: #{tpu_custom_call.1} parent=1 // pred_check_branch
      %1090 = sbr.rel (0) target = $region49
    $region48: #{tpu_custom_call.1} parent=1 // pred_region
      %s1092 = ssub.s32 256, 256
      %1093 = vsyncadd [#allocation7], %s1092
      %s1094 = sshll.u32 [#allocation13], 4
      %s1095 = int_to_ptr.vmem [resolvable:$true] %s1094
      %1100 = dma.vmem_to_hbm [thread:$0]  %s1095, 256, %s7, [#allocation7], 128, 128, 8
    $region49: #{tpu_custom_call.1} parent=1 // pred_fallthru
      _
    // Predicated region
    $region50: #{tpu_custom_call.1} parent=1 // pred_check
      _
    $region51: #{tpu_custom_call.1} parent=1 // pred_check_branch
      %1102 = sbr.rel (0) target = $region53
    $region52: #{tpu_custom_call.1} parent=1 // pred_region
      %1103 = dma.done [#allocation7], 256
    $region53: #{tpu_custom_call.1} parent=1 // pred_fallthru
      _
    %1104 = vsyncpa [#allocation6], 1
    %1105 = vsyncpa [#allocation9], 1
    %1106 = vsyncpa [#allocation12], 1
    %1107 = vsyncpa [#allocation7], 1

</llo_original>
